<compile_context>
chip_gen: v6e
topology: v6e:2x2x1
jax: 0.10.0
libtpu: 0.0.40
codegen_flags: <defaults>
</compile_context>

<pallas_src>
import functools
import math

import jax
import jax.numpy as jnp
from jax.experimental import pallas as pl
from jax.experimental.pallas import tpu as pltpu


# ----------------------------------------------------------------------------
# TPU generation / physical VMEM detection (drives tiling heuristics only).
# ----------------------------------------------------------------------------
@functools.lru_cache(maxsize=1)
def _tpu_generation():
    try:
        kind = jax.devices()[0].device_kind.lower()
    except Exception:
        return "unknown"
    if "v5" in kind:
        return "v5"
    if "v6" in kind:
        return "v6e"
    if "v7" in kind or "7x" in kind:
        return "v7x"
    return "unknown"


@functools.lru_cache(maxsize=1)
def _physical_vmem_bytes():
    try:
        cap = int(pltpu.get_tpu_info().vmem_capacity_bytes)
        if cap > 0:
            return cap
    except Exception:
        pass
    gen = _tpu_generation()
    if gen in ("v5", "v6e"):
        return 128 << 20
    return 64 << 20            # v7x / unknown: conservative


# ----------------------------------------------------------------------------
# Capability probe: single-buffered replicated weights via pl.Buffered(1).
# A tiny dedicated kernel is compiled once; genuine compile/OOM errors of the
# real layer kernels are never swallowed by this check.
# ----------------------------------------------------------------------------
_BUFFERED_OK = None


def _buffered_weights_supported():
    global _BUFFERED_OK
    if _BUFFERED_OK is None:
        try:
            def probe(x_ref, w_ref, o_ref):
                o_ref[...] = x_ref[...] + w_ref[...]

            f = pl.pallas_call(
                probe,
                out_shape=jax.ShapeDtypeStruct((16, 128), jnp.float32),
                grid=(2,),
                in_specs=[
                    pl.BlockSpec((8, 128), lambda i: (i, 0)),
                    pl.BlockSpec((8, 128), lambda i: (0, 0),
                                 pipeline_mode=pl.Buffered(1)),
                ],
                out_specs=pl.BlockSpec((8, 128), lambda i: (i, 0)),
            )
            jax.block_until_ready(
                f(jnp.zeros((16, 128), jnp.float32),
                  jnp.ones((8, 128), jnp.float32)))
            _BUFFERED_OK = True
        except Exception:      # probe only gates an optimization
            _BUFFERED_OK = False
    return _BUFFERED_OK


# ----------------------------------------------------------------------------
# Pallas kernel: one BackboneTransformerLayer for a (TB, S, H) batch tile.
# ----------------------------------------------------------------------------
def _layer_kernel(x_ref, kv_ref, mask_ref,
                  wq_ref, wk_ref, wv_ref, wo_ref, w1_ref, w2_ref, bias_ref,
                  out_ref, attn_ref, *,
                  num_heads, head_dim, x_scale, kv_scale, exp_bf16):
    TB, S, H = x_ref.shape
    Sc = kv_ref.shape[1]
    F = w1_ref.shape[1]

    # fp32 residual stream; embedding_norm_scalar folded in here (layer 0).
    x = x_ref[...].astype(jnp.float32)
    if x_scale != 1.0:
        x = x * x_scale
    x2 = x.reshape(TB * S, H)                  # flatten batch -> big MXU M dim
    x_bf = x2.astype(jnp.bfloat16)

    kv = kv_ref[...]
    if kv_scale != 1.0:
        kv = kv.astype(jnp.float32) * kv_scale
    kv_bf = kv.reshape(TB * Sc, H).astype(jnp.bfloat16)

    # Packed biases (fp32, added to fp32 accumulators).
    bq = bias_ref[0:1, :H]
    bk = bias_ref[1:2, :H]
    bv = bias_ref[2:3, :H]
    bo = bias_ref[3:4, :H]
    b1 = bias_ref[4:5, :F]
    b2 = bias_ref[5:6, :H]

    # QKV projections: bf16 inputs/weights, fp32 accumulation.
    # wq / bq already carry the 1/sqrt(head_dim) scale (folded on the host).
    q = jnp.dot(x_bf, wq_ref[...], preferred_element_type=jnp.float32) + bq
    k = jnp.dot(kv_bf, wk_ref[...], preferred_element_type=jnp.float32) + bk
    v = jnp.dot(kv_bf, wv_ref[...], preferred_element_type=jnp.float32) + bv

    # Cast q/k/v to bf16 ONCE; per-head slicing happens on the bf16 arrays so
    # the fp32 projections are not kept live across the unrolled head loop.
    q = q.astype(jnp.bfloat16).reshape(TB, S, H)
    k = k.astype(jnp.bfloat16).reshape(TB, Sc, H)
    v = v.astype(jnp.bfloat16).reshape(TB, Sc, H)

    # Additive key mask, broadcast ONCE (hoisted out of the head loop).
    neg = jnp.where(mask_ref[...].astype(jnp.float32) > 0.5, 0.0, -1e30)
    neg = jnp.broadcast_to(neg, (TB, S, Sc))                    # [TB, S, Sc]

    # TODO(synk): if the lowered MLIR shows per-head vxpose of kh feeding the
    # scores einsum, pre-transpose k once per grid step instead.
    ctx_parts = []
    for h in range(num_heads):                 # static unroll; heads are few
        lo = h * head_dim
        hi = lo + head_dim
        qh = q[:, :, lo:hi]
        kh = k[:, :, lo:hi]
        vh = v[:, :, lo:hi]

        # Scores batched over the TB batch elements.
        s = jnp.einsum("bqd,bkd->bqk", qh, kh,
                       preferred_element_type=jnp.float32)      # [TB, S, Sc]
        s = s + neg
        s = s - jnp.max(s, axis=-1, keepdims=True)
        if exp_bf16:
            # v6e/v7x only: bf16 EUP -> ~2x exp throughput on the single EUP
            # slot and half the VPU traffic on p. (v5e has no bf16 VPU/EUP.)
            e = jnp.exp(s.astype(jnp.bfloat16))
            denom = jnp.sum(e.astype(jnp.float32), axis=-1, keepdims=True)
            p = e * pl.reciprocal(denom, approx=True).astype(jnp.bfloat16)
        else:
            e = jnp.exp(s)
            p = e * pl.reciprocal(jnp.sum(e, axis=-1, keepdims=True),
                                  approx=True)
        # NOTE: approx reciprocal -> attention rows sum to 1 only approximately.
        attn_ref[:, h:h + 1, :, :] = p[:, None].astype(attn_ref.dtype)

        ctx_parts.append(
            jnp.einsum("bqk,bkd->bqd", p.astype(jnp.bfloat16), vh,
                       preferred_element_type=jnp.float32))     # [TB, S, dh]

    # Single fully-packed K=H output projection (instead of nH dots with
    # K=head_dim, which pad to the 128/256-wide MXU contraction).
    ctx = jnp.concatenate(ctx_parts, axis=-1).reshape(TB * S, H)
    attn_out = jnp.dot(ctx.astype(jnp.bfloat16), wo_ref[...],
                       preferred_element_type=jnp.float32)

    h1 = x2 + attn_out + bo                                      # residual 1
    ff = jnp.maximum(
        jnp.dot(h1.astype(jnp.bfloat16), w1_ref[...],
                preferred_element_type=jnp.float32) + b1, 0.0)
    y = h1 + jnp.dot(ff.astype(jnp.bfloat16), w2_ref[...],
                     preferred_element_type=jnp.float32) + b2    # residual 2
    out_ref[...] = y.reshape(TB, S, H)


# ----------------------------------------------------------------------------
# Tiling / VMEM heuristics (generation-aware).
# ----------------------------------------------------------------------------
def _choose_batch_tile(B, S, Sc, H, F, nH):
    """Batch elements per grid step.

    v5e/v6e (128 MiB VMEM): pick the largest divisor of B whose working set
    fits ~20 MiB (big TB*S matmul M dim, few ~0.35 us grid-step overheads).
    v7x (64 MiB VMEM, 2 TensorCores): tighter ~6 MiB budget and force
    B // TB >= 2 whenever B > 1 so the parallel grid axis feeds both cores.
    """
    gen = _tpu_generation()
    f32, bf16 = 4, 2

    def act_bytes(d):
        rows, kvr = d * S, d * Sc
        return (f32 * (3 * rows * H + rows * F + 2 * nH * d * S * Sc
                       + 2 * kvr * H)
                + bf16 * (3 * rows * H + 3 * kvr * H))

    budget = {"v7x": 6 << 20, "v5": 20 << 20, "v6e": 20 << 20}.get(gen, 8 << 20)
    divisors = [d for d in range(1, B + 1) if B % d == 0]
    fitting = [d for d in divisors if act_bytes(d) <= budget] or [1]
    if gen == "v7x" and B > 1:
        multi = [d for d in fitting if B // d >= 2]
        if multi:
            return max(multi)
    return max(fitting)


def _vmem_limit_bytes(TB, S, Sc, H, F, nH, attn_itemsize, single_buffer_weights):
    """Scoped-VMEM budget capped at the physical VMEM minus headroom."""
    bf16, f32 = 2, 4
    W = max(H, F)
    weights = bf16 * (4 * H * H + 2 * H * F) + f32 * 8 * W
    wmult = 1 if single_buffer_weights else 2        # Buffered(1) -> one copy
    io = (f32 * TB * S * H                           # x block
          + bf16 * TB * Sc * H                       # kv block
          + f32 * TB * Sc                            # mask
          + f32 * TB * S * H                         # hidden out
          + attn_itemsize * TB * nH * S * Sc)        # attn out
    scratch = (f32 * TB * (2 * S * H + 2 * Sc * H + 3 * S * Sc + S * F
                           + 3 * S * H)
               + bf16 * TB * (2 * S * H + 2 * Sc * H))
    need = wmult * weights + 2 * io + scratch
    cap = max(_physical_vmem_bytes() - (8 << 20), 16 << 20)
    return int(min(max(int(need * 1.25), 32 << 20), cap))


# ----------------------------------------------------------------------------
# Host-side, once-per-weights preparation.
# ----------------------------------------------------------------------------
def prepare_layer_params(p, num_heads):
    """bf16 weights, 1/sqrt(head_dim) folded into wq/bq, and the six bias
    vectors packed into one (8, max(H, F)) fp32 array (one DMA per grid step
    instead of six padded (1,H)/(1,F) blocks)."""
    if "bias_pack" in p:
        return p
    H = p["wq"].shape[0]
    F = p["w1"].shape[1]
    scale = 1.0 / math.sqrt(H // num_heads)
    W = max(H, F)
    bias_pack = jnp.zeros((8, W), jnp.float32)
    bias_pack = bias_pack.at[0, :H].set(p["bq"].reshape(-1).astype(jnp.float32) * scale)
    bias_pack = bias_pack.at[1, :H].set(p["bk"].reshape(-1).astype(jnp.float32))
    bias_pack = bias_pack.at[2, :H].set(p["bv"].reshape(-1).astype(jnp.float32))
    bias_pack = bias_pack.at[3, :H].set(p["bo"].reshape(-1).astype(jnp.float32))
    bias_pack = bias_pack.at[4, :F].set(p["b1"].reshape(-1).astype(jnp.float32))
    bias_pack = bias_pack.at[5, :H].set(p["b2"].reshape(-1).astype(jnp.float32))
    return dict(
        wq=(p["wq"].astype(jnp.float32) * scale).astype(jnp.bfloat16),
        wk=p["wk"].astype(jnp.bfloat16),
        wv=p["wv"].astype(jnp.bfloat16),
        wo=p["wo"].astype(jnp.bfloat16),
        w1=p["w1"].astype(jnp.bfloat16),
        w2=p["w2"].astype(jnp.bfloat16),
        bias_pack=bias_pack,
    )


# ----------------------------------------------------------------------------
# One decoder layer via pallas_call.
# ----------------------------------------------------------------------------
def transformer_layer_pallas(x, kv, mask, params, *, num_heads,
                             x_scale=1.0, kv_scale=1.0,
                             attn_dtype=jnp.bfloat16, batch_tile=None):
    """Returns (hidden_state [B,S,H] f32, attention weights [B,nH,S,Sc])."""
    params = prepare_layer_params(params, num_heads)
    B, S, H = x.shape
    Sc = kv.shape[1]
    F = params["w1"].shape[1]
    assert H % num_heads == 0
    head_dim = H // num_heads

    TB = batch_tile if batch_tile is not None else _choose_batch_tile(
        B, S, Sc, H, F, num_heads)
    assert B % TB == 0

    single_buf = _buffered_weights_supported()
    exp_bf16 = _tpu_generation() in ("v6e", "v7x")

    kernel = functools.partial(
        _layer_kernel, num_heads=num_heads, head_dim=head_dim,
        x_scale=float(x_scale), kv_scale=float(kv_scale), exp_bf16=exp_bf16)

    bias_pack = params["bias_pack"]
    W = bias_pack.shape[1]

    def rep(shape):
        idx = lambda b, _s=shape: (0,) * len(_s)
        if single_buf:
            # Constant index_map + single VMEM copy (matters for large H/F on
            # v7x where double-buffered weights blow the 64 MiB VMEM budget).
            return pl.BlockSpec(shape, idx, pipeline_mode=pl.Buffered(1))
        return pl.BlockSpec(shape, idx)

    # TODO(synk): for production shapes, pad Sc to a multiple of 128 on the
    # caller side so the [.., S, Sc] attention writeback uses unmasked stores.
    in_specs = [
        pl.BlockSpec((TB, S, H), lambda b: (b, 0, 0)),       # x (residual)
        pl.BlockSpec((TB, Sc, H), lambda b: (b, 0, 0)),      # kv source
        pl.BlockSpec((TB, 1, Sc), lambda b: (b, 0, 0)),      # key mask
        rep((H, H)), rep((H, H)), rep((H, H)), rep((H, H)),  # wq wk wv wo
        rep((H, F)), rep((F, H)),                            # w1 w2
        rep((8, W)),                                         # packed biases
    ]
    out_specs = (
        pl.BlockSpec((TB, S, H), lambda b: (b, 0, 0)),
        pl.BlockSpec((TB, num_heads, S, Sc), lambda b: (b, 0, 0, 0)),
    )
    out_shape = (
        jax.ShapeDtypeStruct((B, S, H), jnp.float32),
        jax.ShapeDtypeStruct((B, num_heads, S, Sc), attn_dtype),
    )
    vmem_limit = _vmem_limit_bytes(
        TB, S, Sc, H, F, num_heads, jnp.dtype(attn_dtype).itemsize, single_buf)

    return pl.pallas_call(
        kernel,
        out_shape=out_shape,
        grid=(B // TB,),
        in_specs=in_specs,
        out_specs=out_specs,
        compiler_params=pltpu.CompilerParams(
            dimension_semantics=("parallel",),
            vmem_limit_bytes=vmem_limit),
    )(x, kv, mask,
      params["wq"], params["wk"], params["wv"], params["wo"],
      params["w1"], params["w2"], bias_pack)


# ----------------------------------------------------------------------------
# Decoder wrapper (glue): embedding scale folded into layer 0 + layer loop.
# ----------------------------------------------------------------------------
def backbone_transformer_decoder(batch, layer_params, *, num_heads,
                                 embedding_norm_scalar=1.0,
                                 is_cross_attention=True,
                                 attn_dtype=jnp.bfloat16):
    # TODO(synk): BackboneEmbedding('theoretical') internals unavailable;
    # modeled as decoder_input scaled by embedding_norm_scalar (folded into
    # the first layer's kernel -> no extra HBM pass over [B,S,H]).
    hidden_state = batch["decoder_input"]
    cross_hidden_states = batch["cross_hidden_states"]
    mask = batch["batch_mask_decoder"]

    if not layer_params:
        return hidden_state * embedding_norm_scalar, []

    prepared = [prepare_layer_params(p, num_heads) for p in layer_params]

    if is_cross_attention:
        # kv never enters the fp32 residual; cast ONCE outside the layer loop
        # so every layer reads half the HBM for the [B,Sc,H] source.
        cross_kv = cross_hidden_states.astype(jnp.bfloat16)
    else:
        assert hidden_state.shape[1] == mask.shape[-1], (
            "self-attention requires the key-mask length to equal the query "
            "sequence length")

    all_attention_weights = []
    for i, p in enumerate(prepared):
        x_scale = embedding_norm_scalar if i == 0 else 1.0
        if is_cross_attention:
            kv, kv_scale = cross_kv, 1.0
        else:
            kv, kv_scale = hidden_state, x_scale
        hidden_state, attn = transformer_layer_pallas(
            hidden_state, kv, mask, p, num_heads=num_heads,
            x_scale=x_scale, kv_scale=kv_scale, attn_dtype=attn_dtype)
        all_attention_weights.append(attn)
    return hidden_state, all_attention_weights


# ----------------------------------------------------------------------------
# Pure-JAX fp32 reference for correctness check.
# ----------------------------------------------------------------------------
def _ref_layer(x, kv, mask, p, num_heads):
    B, S, H = x.shape
    Sc = kv.shape[1]
    dh = H // num_heads
    q = x @ p["wq"] + p["bq"]
    k = kv @ p["wk"] + p["bk"]
    v = kv @ p["wv"] + p["bv"]
    q = q.reshape(B, S, num_heads, dh).transpose(0, 2, 1, 3)
    k = k.reshape(B, Sc, num_heads, dh).transpose(0, 2, 1, 3)
    v = v.reshape(B, Sc, num_heads, dh).transpose(0, 2, 1, 3)
    s = jnp.einsum("bhqd,bhkd->bhqk", q, k) / math.sqrt(dh)
    s = s + jnp.where(mask[:, None, :, :] > 0.5, 0.0, -1e30)
    s = s - s.max(-1, keepdims=True)
    pw = jnp.exp(s)
    pw = pw / pw.sum(-1, keepdims=True)
    o = jnp.einsum("bhqk,bhkd->bhqd", pw, v).transpose(0, 2, 1, 3).reshape(B, S, H)
    h1 = x + o @ p["wo"] + p["bo"]
    ff = jnp.maximum(h1 @ p["w1"] + p["b1"], 0.0)
    y = h1 + ff @ p["w2"] + p["b2"]
    return y, pw


def _ref_decoder(batch, layer_params, *, num_heads, embedding_norm_scalar=1.0,
                 is_cross_attention=True):
    h = batch["decoder_input"] * embedding_norm_scalar
    attns = []
    for p in layer_params:
        kv = batch["cross_hidden_states"] if is_cross_attention else h
        h, a = _ref_layer(h, kv, batch["batch_mask_decoder"], p, num_heads)
        attns.append(a)
    return h, attns


# ----------------------------------------------------------------------------
# Deterministic parameter init.
# ----------------------------------------------------------------------------
def init_layer_params(key, H, F, num_layers):
    params = []
    for layer_idx in range(num_layers):
        k = jax.random.fold_in(key, layer_idx)
        ks = jax.random.split(k, 12)
        s = 1.0 / math.sqrt(H)
        params.append(dict(
            wq=jax.random.normal(ks[0], (H, H), jnp.float32) * s,
            wk=jax.random.normal(ks[1], (H, H), jnp.float32) * s,
            wv=jax.random.normal(ks[2], (H, H), jnp.float32) * s,
            wo=jax.random.normal(ks[3], (H, H), jnp.float32) * s,
            w1=jax.random.normal(ks[4], (H, F), jnp.float32) * s,
            w2=jax.random.normal(ks[5], (F, H), jnp.float32) * (1.0 / math.sqrt(F)),
            bq=jax.random.normal(ks[6], (1, H), jnp.float32) * 0.01,
            bk=jax.random.normal(ks[7], (1, H), jnp.float32) * 0.01,
            bv=jax.random.normal(ks[8], (1, H), jnp.float32) * 0.01,
            bo=jax.random.normal(ks[9], (1, H), jnp.float32) * 0.01,
            b1=jax.random.normal(ks[10], (1, F), jnp.float32) * 0.01,
            b2=jax.random.normal(ks[11], (1, H), jnp.float32) * 0.01,
        ))
    return params


if __name__ == "__main__":
    B, S, Sc, H = 2, 8, 16, 32
    num_heads, num_layers = 2, 2
    F = 4 * H
    embedding_norm_scalar = 1.5

    key = jax.random.PRNGKey(0)
    k_in, k_cross, k_par = jax.random.split(key, 3)

    decoder_input = jax.random.normal(k_in, (B, S, H), jnp.float32)
    cross_hidden = jax.random.normal(k_cross, (B, Sc, H), jnp.float32)
    mask = jnp.ones((B, 1, Sc), jnp.float32).at[:, :, -3:].set(0.0)  # mask 3 keys

    batch = {
        "decoder_input": decoder_input,
        "cross_hidden_states": cross_hidden,
        "batch_mask_decoder": mask,
    }
    layer_params = init_layer_params(k_par, H, F, num_layers)

    hidden, attn_list = backbone_transformer_decoder(
        batch, layer_params, num_heads=num_heads,
        embedding_norm_scalar=embedding_norm_scalar, is_cross_attention=True)
    hidden = jax.block_until_ready(hidden)
    attn_list = [jax.block_until_ready(a) for a in attn_list]

    ref_hidden, ref_attn = _ref_decoder(
        batch, layer_params, num_heads=num_heads,
        embedding_norm_scalar=embedding_norm_scalar, is_cross_attention=True)

    # Kernel uses bf16 MXU matmuls (fp32 accumulation), approx softmax
    # reciprocal and bf16 attention-weight outputs; compare against the fp32
    # reference with bf16-aware bounds.
    err_h = float(jnp.max(jnp.abs(hidden - ref_hidden)))
    ref_scale = float(jnp.max(jnp.abs(ref_hidden)))
    assert err_h <= 3e-2 * ref_scale + 1e-2, (err_h, ref_scale)
    for a, ra in zip(attn_list, ref_attn):
        err_a = float(jnp.max(jnp.abs(a.astype(jnp.float32) - ra)))
        assert err_a <= 3e-2, err_a

    print("KERNEL_OK")
</pallas_src>

<mosaic_0001>
module attributes {stable_mosaic.version = 11 : i64} {
  func.func @probe(%arg0: i32, %arg1: memref<8x128xf32, #tpu.memory_space<vmem>>, %arg2: memref<8x128xf32, #tpu.memory_space<vmem>>, %arg3: memref<8x128xf32, #tpu.memory_space<vmem>>) attributes {dimension_semantics = [#tpu.dimension_semantics<arbitrary>], iteration_bounds = array<i64: 2>, scalar_prefetch = 0 : i64, scratch_operands = 0 : i64, tpu.core_type = #tpu.core_type<tc>, window_params = [{transform_indices = @transform_0, window_bounds = array<i64: 8, 128>}, {pipeline_mode = #tpu.pipeline_mode<synchronous>, transform_indices = @transform_1, window_bounds = array<i64: 8, 128>}, {transform_indices = @transform_2, window_bounds = array<i64: 8, 128>}]} {
    %c0 = arith.constant 0 : index
    %c0_0 = arith.constant 0 : index
    %0 = vector.load %arg1[%c0, %c0_0] : memref<8x128xf32, #tpu.memory_space<vmem>>, vector<8x128xf32>
    %c0_1 = arith.constant 0 : index
    %c0_2 = arith.constant 0 : index
    %1 = vector.load %arg2[%c0_1, %c0_2] : memref<8x128xf32, #tpu.memory_space<vmem>>, vector<8x128xf32>
    %2 = arith.addf %0, %1 : vector<8x128xf32>
    %c0_3 = arith.constant 0 : index
    %c0_4 = arith.constant 0 : index
    %3 = vector.load %arg3[%c0_3, %c0_4] : memref<8x128xf32, #tpu.memory_space<vmem>>, vector<8x128xf32>
    tpu.vector_store %arg3[%c0_3, %c0_4], %2 {strides = array<i32>} : memref<8x128xf32, #tpu.memory_space<vmem>>, vector<8x128xf32>,
    return
  }
  func.func @transform_0(%arg0: i32) -> (i32, i32) {
    %c0_i32 = arith.constant 0 : i32
    %c0_i32_0 = arith.constant 0 : i32
    return %arg0, %c0_i32 : i32, i32
  }
  func.func @transform_1(%arg0: i32) -> (i32, i32) {
    %c0_i32 = arith.constant 0 : i32
    %c0_i32_0 = arith.constant 0 : i32
    %c0_i32_1 = arith.constant 0 : i32
    return %c0_i32, %c0_i32_0 : i32, i32
  }
  func.func @transform_2(%arg0: i32) -> (i32, i32) {
    %c0_i32 = arith.constant 0 : i32
    %c0_i32_0 = arith.constant 0 : i32
    return %arg0, %c0_i32 : i32, i32
  }
}

module attributes {stable_mosaic.version = 11 : i64} {
  func.func @_layer_kernel(%arg0: i32, %arg1: memref<2x8x32xf32, #tpu.memory_space<vmem>>, %arg2: memref<2x16x32xbf16, #tpu.memory_space<vmem>>, %arg3: memref<2x1x16xf32, #tpu.memory_space<vmem>>, %arg4: memref<32x32xbf16, #tpu.memory_space<vmem>>, %arg5: memref<32x32xbf16, #tpu.memory_space<vmem>>, %arg6: memref<32x32xbf16, #tpu.memory_space<vmem>>, %arg7: memref<32x32xbf16, #tpu.memory_space<vmem>>, %arg8: memref<32x128xbf16, #tpu.memory_space<vmem>>, %arg9: memref<128x32xbf16, #tpu.memory_space<vmem>>, %arg10: memref<8x128xf32, #tpu.memory_space<vmem>>, %arg11: memref<2x8x32xf32, #tpu.memory_space<vmem>>, %arg12: memref<2x2x8x16xbf16, #tpu.memory_space<vmem>>) attributes {dimension_semantics = [#tpu.dimension_semantics<parallel>], iteration_bounds = array<i64: 1>, scalar_prefetch = 0 : i64, scratch_operands = 0 : i64, tpu.core_type = #tpu.core_type<tc>, window_params = [{transform_indices = @transform_0, window_bounds = array<i64: 2, 8, 32>}, {transform_indices = @transform_1, window_bounds = array<i64: 2, 16, 32>}, {transform_indices = @transform_2, window_bounds = array<i64: 2, 1, 16>}, {pipeline_mode = #tpu.pipeline_mode<synchronous>, transform_indices = @transform_3, window_bounds = array<i64: 32, 32>}, {pipeline_mode = #tpu.pipeline_mode<synchronous>, transform_indices = @transform_4, window_bounds = array<i64: 32, 32>}, {pipeline_mode = #tpu.pipeline_mode<synchronous>, transform_indices = @transform_5, window_bounds = array<i64: 32, 32>}, {pipeline_mode = #tpu.pipeline_mode<synchronous>, transform_indices = @transform_6, window_bounds = array<i64: 32, 32>}, {pipeline_mode = #tpu.pipeline_mode<synchronous>, transform_indices = @transform_7, window_bounds = array<i64: 32, 128>}, {pipeline_mode = #tpu.pipeline_mode<synchronous>, transform_indices = @transform_8, window_bounds = array<i64: 128, 32>}, {pipeline_mode = #tpu.pipeline_mode<synchronous>, transform_indices = @transform_9, window_bounds = array<i64: 8, 128>}, {transform_indices = @transform_10, window_bounds = array<i64: 2, 8, 32>}, {transform_indices = @transform_11, window_bounds = array<i64: 2, 2, 8, 16>}]} {
    %c0 = arith.constant 0 : index
    %c0_0 = arith.constant 0 : index
    %c0_1 = arith.constant 0 : index
    %0 = vector.load %arg1[%c0, %c0_0, %c0_1] : memref<2x8x32xf32, #tpu.memory_space<vmem>>, vector<2x8x32xf32>
    %cst = arith.constant 1.500000e+00 : f32
    %1 = vector.broadcast %cst : f32 to vector<2x8x32xf32>
    %2 = arith.mulf %0, %1 : vector<2x8x32xf32>
    %3 = vector.shape_cast %2 : vector<2x8x32xf32> to vector<16x32xf32>
    %4 = arith.truncf %3 : vector<16x32xf32> to vector<16x32xbf16>
    %c0_2 = arith.constant 0 : index
    %c0_3 = arith.constant 0 : index
    %c0_4 = arith.constant 0 : index
    %5 = vector.load %arg2[%c0_2, %c0_3, %c0_4] : memref<2x16x32xbf16, #tpu.memory_space<vmem>>, vector<2x16x32xbf16>
    %6 = vector.shape_cast %5 : vector<2x16x32xbf16> to vector<32x32xbf16>
    %c0_5 = arith.constant 0 : index
    %c0_6 = arith.constant 0 : index
    %7 = vector.load %arg10[%c0_5, %c0_6] : memref<8x128xf32, #tpu.memory_space<vmem>>, vector<1x32xf32>
    %c1 = arith.constant 1 : index
    %c0_7 = arith.constant 0 : index
    %8 = vector.load %arg10[%c1, %c0_7] : memref<8x128xf32, #tpu.memory_space<vmem>>, vector<1x32xf32>
    %c2 = arith.constant 2 : index
    %c0_8 = arith.constant 0 : index
    %9 = vector.load %arg10[%c2, %c0_8] : memref<8x128xf32, #tpu.memory_space<vmem>>, vector<1x32xf32>
    %c3 = arith.constant 3 : index
    %c0_9 = arith.constant 0 : index
    %10 = vector.load %arg10[%c3, %c0_9] : memref<8x128xf32, #tpu.memory_space<vmem>>, vector<1x32xf32>
    %c4 = arith.constant 4 : index
    %c0_10 = arith.constant 0 : index
    %11 = vector.load %arg10[%c4, %c0_10] : memref<8x128xf32, #tpu.memory_space<vmem>>, vector<1x128xf32>
    %c5 = arith.constant 5 : index
    %c0_11 = arith.constant 0 : index
    %12 = vector.load %arg10[%c5, %c0_11] : memref<8x128xf32, #tpu.memory_space<vmem>>, vector<1x32xf32>
    %c0_12 = arith.constant 0 : index
    %c0_13 = arith.constant 0 : index
    %13 = vector.load %arg4[%c0_12, %c0_13] : memref<32x32xbf16, #tpu.memory_space<vmem>>, vector<32x32xbf16>
    %cst_14 = arith.constant dense<0.000000e+00> : vector<16x32xf32>
    %14 = tpu.matmul %4, %13, %cst_14 {dimension_numbers = #tpu.dot_dimension_numbers<[1], [0], [0], [1], [0, 0, 1, 1], [], []>} : vector<16x32xbf16>, vector<32x32xbf16>, vector<16x32xf32> -> vector<16x32xf32>
    %15 = vector.broadcast %7 : vector<1x32xf32> to vector<16x32xf32>
    %16 = arith.addf %14, %15 : vector<16x32xf32>
    %c0_15 = arith.constant 0 : index
    %c0_16 = arith.constant 0 : index
    %17 = vector.load %arg5[%c0_15, %c0_16] : memref<32x32xbf16, #tpu.memory_space<vmem>>, vector<32x32xbf16>
    %cst_17 = arith.constant dense<0.000000e+00> : vector<32x32xf32>
    %18 = tpu.matmul %6, %17, %cst_17 {dimension_numbers = #tpu.dot_dimension_numbers<[1], [0], [0], [1], [0, 0, 1, 1], [], []>} : vector<32x32xbf16>, vector<32x32xbf16>, vector<32x32xf32> -> vector<32x32xf32>
    %19 = vector.broadcast %8 : vector<1x32xf32> to vector<32x32xf32>
    %20 = arith.addf %18, %19 : vector<32x32xf32>
    %c0_18 = arith.constant 0 : index
    %c0_19 = arith.constant 0 : index
    %21 = vector.load %arg6[%c0_18, %c0_19] : memref<32x32xbf16, #tpu.memory_space<vmem>>, vector<32x32xbf16>
    %cst_20 = arith.constant dense<0.000000e+00> : vector<32x32xf32>
    %22 = tpu.matmul %6, %21, %cst_20 {dimension_numbers = #tpu.dot_dimension_numbers<[1], [0], [0], [1], [0, 0, 1, 1], [], []>} : vector<32x32xbf16>, vector<32x32xbf16>, vector<32x32xf32> -> vector<32x32xf32>
    %23 = vector.broadcast %9 : vector<1x32xf32> to vector<32x32xf32>
    %24 = arith.addf %22, %23 : vector<32x32xf32>
    %25 = arith.truncf %16 : vector<16x32xf32> to vector<16x32xbf16>
    %26 = vector.shape_cast %25 : vector<16x32xbf16> to vector<2x8x32xbf16>
    %27 = arith.truncf %20 : vector<32x32xf32> to vector<32x32xbf16>
    %28 = vector.shape_cast %27 : vector<32x32xbf16> to vector<2x16x32xbf16>
    %29 = arith.truncf %24 : vector<32x32xf32> to vector<32x32xbf16>
    %30 = vector.shape_cast %29 : vector<32x32xbf16> to vector<2x16x32xbf16>
    %c0_21 = arith.constant 0 : index
    %c0_22 = arith.constant 0 : index
    %c0_23 = arith.constant 0 : index
    %31 = vector.load %arg3[%c0_21, %c0_22, %c0_23] : memref<2x1x16xf32, #tpu.memory_space<vmem>>, vector<2x1x16xf32>
    %cst_24 = arith.constant 5.000000e-01 : f32
    %32 = vector.broadcast %cst_24 : f32 to vector<2x1x16xf32>
    %33 = arith.cmpf ogt, %31, %32 : vector<2x1x16xf32>
    %cst_25 = arith.constant 0.000000e+00 : f32
    %cst_26 = arith.constant -1.000000e+30 : f32
    %34 = vector.broadcast %cst_25 : f32 to vector<2x1x16xf32>
    %35 = vector.broadcast %cst_26 : f32 to vector<2x1x16xf32>
    %36 = arith.select %33, %34, %35 : vector<2x1x16xi1>, vector<2x1x16xf32>
    %37 = vector.shape_cast %36 : vector<2x1x16xf32> to vector<2x1x16xf32>
    %38 = vector.broadcast %37 : vector<2x1x16xf32> to vector<2x8x16xf32>
    %39 = vector.extract_strided_slice %26 {offsets = [0, 0, 0], sizes = [2, 8, 16], strides = [1, 1, 1]} : vector<2x8x32xbf16> to vector<2x8x16xbf16>
    %40 = vector.extract_strided_slice %28 {offsets = [0, 0, 0], sizes = [2, 16, 16], strides = [1, 1, 1]} : vector<2x16x32xbf16> to vector<2x16x16xbf16>
    %41 = vector.extract_strided_slice %30 {offsets = [0, 0, 0], sizes = [2, 16, 16], strides = [1, 1, 1]} : vector<2x16x32xbf16> to vector<2x16x16xbf16>
    "tpu.trace_start"() <{level = 10 : i32, message = "bqd,bkd->bqk"}> : () -> ()
    %cst_27 = arith.constant dense<0.000000e+00> : vector<2x8x16xf32>
    %42 = tpu.matmul %39, %40, %cst_27 {dimension_numbers = #tpu.dot_dimension_numbers<[2], [2], [1], [1], [0, 0, 0, 1, 1, 1], [0], [0]>} : vector<2x8x16xbf16>, vector<2x16x16xbf16>, vector<2x8x16xf32> -> vector<2x8x16xf32>
    "tpu.trace_stop"() : () -> ()
    %43 = arith.addf %42, %38 : vector<2x8x16xf32>
    %cst_28 = arith.constant dense<0xFF800000> : vector<2x8xf32>
    %44 = vector.multi_reduction <maximumf>, %43, %cst_28 [2] : vector<2x8x16xf32> to vector<2x8xf32>
    %45 = vector.shape_cast %44 : vector<2x8xf32> to vector<2x8x1xf32>
    %46 = vector.broadcast %45 : vector<2x8x1xf32> to vector<2x8x16xf32>
    %47 = arith.subf %43, %46 : vector<2x8x16xf32>
    %48 = math.exp %47 : vector<2x8x16xf32>
    %cst_29 = arith.constant dense<0.000000e+00> : vector<2x8xf32>
    %49 = vector.multi_reduction <add>, %48, %cst_29 [2] : vector<2x8x16xf32> to vector<2x8xf32>
    %50 = vector.shape_cast %49 : vector<2x8xf32> to vector<2x8x1xf32>
    %51 = tpu.reciprocal %50 {approx = true} : vector<2x8x1xf32> -> vector<2x8x1xf32>
    %52 = vector.broadcast %51 : vector<2x8x1xf32> to vector<2x8x16xf32>
    %53 = arith.mulf %48, %52 : vector<2x8x16xf32>
    %54 = vector.shape_cast %53 : vector<2x8x16xf32> to vector<2x1x8x16xf32>
    %55 = arith.truncf %54 : vector<2x1x8x16xf32> to vector<2x1x8x16xbf16>
    %c0_30 = arith.constant 0 : index
    %c0_31 = arith.constant 0 : index
    %c0_32 = arith.constant 0 : index
    %c0_33 = arith.constant 0 : index
    %56 = vector.load %arg12[%c0_30, %c0_31, %c0_32, %c0_33] : memref<2x2x8x16xbf16, #tpu.memory_space<vmem>>, vector<2x1x8x16xbf16>
    tpu.vector_store %arg12[%c0_30, %c0_31, %c0_32, %c0_33], %55 {strides = array<i32>} : memref<2x2x8x16xbf16, #tpu.memory_space<vmem>>, vector<2x1x8x16xbf16>,
    %57 = arith.truncf %53 : vector<2x8x16xf32> to vector<2x8x16xbf16>
    "tpu.trace_start"() <{level = 10 : i32, message = "bqk,bkd->bqd"}> : () -> ()
    %cst_34 = arith.constant dense<0.000000e+00> : vector<2x8x16xf32>
    %58 = tpu.matmul %57, %41, %cst_34 {dimension_numbers = #tpu.dot_dimension_numbers<[2], [1], [1], [2], [0, 0, 0, 1, 1, 2], [0], [0]>} : vector<2x8x16xbf16>, vector<2x16x16xbf16>, vector<2x8x16xf32> -> vector<2x8x16xf32>
    "tpu.trace_stop"() : () -> ()
    %59 = vector.extract_strided_slice %26 {offsets = [0, 0, 16], sizes = [2, 8, 16], strides = [1, 1, 1]} : vector<2x8x32xbf16> to vector<2x8x16xbf16>
    %60 = vector.extract_strided_slice %28 {offsets = [0, 0, 16], sizes = [2, 16, 16], strides = [1, 1, 1]} : vector<2x16x32xbf16> to vector<2x16x16xbf16>
    %61 = vector.extract_strided_slice %30 {offsets = [0, 0, 16], sizes = [2, 16, 16], strides = [1, 1, 1]} : vector<2x16x32xbf16> to vector<2x16x16xbf16>
    "tpu.trace_start"() <{level = 10 : i32, message = "bqd,bkd->bqk"}> : () -> ()
    %cst_35 = arith.constant dense<0.000000e+00> : vector<2x8x16xf32>
    %62 = tpu.matmul %59, %60, %cst_35 {dimension_numbers = #tpu.dot_dimension_numbers<[2], [2], [1], [1], [0, 0, 0, 1, 1, 1], [0], [0]>} : vector<2x8x16xbf16>, vector<2x16x16xbf16>, vector<2x8x16xf32> -> vector<2x8x16xf32>
    "tpu.trace_stop"() : () -> ()
    %63 = arith.addf %62, %38 : vector<2x8x16xf32>
    %cst_36 = arith.constant dense<0xFF800000> : vector<2x8xf32>
    %64 = vector.multi_reduction <maximumf>, %63, %cst_36 [2] : vector<2x8x16xf32> to vector<2x8xf32>
    %65 = vector.shape_cast %64 : vector<2x8xf32> to vector<2x8x1xf32>
    %66 = vector.broadcast %65 : vector<2x8x1xf32> to vector<2x8x16xf32>
    %67 = arith.subf %63, %66 : vector<2x8x16xf32>
    %68 = math.exp %67 : vector<2x8x16xf32>
    %cst_37 = arith.constant dense<0.000000e+00> : vector<2x8xf32>
    %69 = vector.multi_reduction <add>, %68, %cst_37 [2] : vector<2x8x16xf32> to vector<2x8xf32>
    %70 = vector.shape_cast %69 : vector<2x8xf32> to vector<2x8x1xf32>
    %71 = tpu.reciprocal %70 {approx = true} : vector<2x8x1xf32> -> vector<2x8x1xf32>
    %72 = vector.broadcast %71 : vector<2x8x1xf32> to vector<2x8x16xf32>
    %73 = arith.mulf %68, %72 : vector<2x8x16xf32>
    %74 = vector.shape_cast %73 : vector<2x8x16xf32> to vector<2x1x8x16xf32>
    %75 = arith.truncf %74 : vector<2x1x8x16xf32> to vector<2x1x8x16xbf16>
    %c0_38 = arith.constant 0 : index
    %c1_39 = arith.constant 1 : index
    %c0_40 = arith.constant 0 : index
    %c0_41 = arith.constant 0 : index
    %76 = vector.load %arg12[%c0_38, %c1_39, %c0_40, %c0_41] : memref<2x2x8x16xbf16, #tpu.memory_space<vmem>>, vector<2x1x8x16xbf16>
    tpu.vector_store %arg12[%c0_38, %c1_39, %c0_40, %c0_41], %75 {strides = array<i32>} : memref<2x2x8x16xbf16, #tpu.memory_space<vmem>>, vector<2x1x8x16xbf16>,
    %77 = arith.truncf %73 : vector<2x8x16xf32> to vector<2x8x16xbf16>
    "tpu.trace_start"() <{level = 10 : i32, message = "bqk,bkd->bqd"}> : () -> ()
    %cst_42 = arith.constant dense<0.000000e+00> : vector<2x8x16xf32>
    %78 = tpu.matmul %77, %61, %cst_42 {dimension_numbers = #tpu.dot_dimension_numbers<[2], [1], [1], [2], [0, 0, 0, 1, 1, 2], [0], [0]>} : vector<2x8x16xbf16>, vector<2x16x16xbf16>, vector<2x8x16xf32> -> vector<2x8x16xf32>
    "tpu.trace_stop"() : () -> ()
    %79 = tpu.concatenate %58, %78 in 2 : vector<2x8x16xf32>, vector<2x8x16xf32> -> vector<2x8x32xf32>
    %80 = vector.shape_cast %79 : vector<2x8x32xf32> to vector<16x32xf32>
    %81 = arith.truncf %80 : vector<16x32xf32> to vector<16x32xbf16>
    %c0_43 = arith.constant 0 : index
    %c0_44 = arith.constant 0 : index
    %82 = vector.load %arg7[%c0_43, %c0_44] : memref<32x32xbf16, #tpu.memory_space<vmem>>, vector<32x32xbf16>
    %cst_45 = arith.constant dense<0.000000e+00> : vector<16x32xf32>
    %83 = tpu.matmul %81, %82, %cst_45 {dimension_numbers = #tpu.dot_dimension_numbers<[1], [0], [0], [1], [0, 0, 1, 1], [], []>} : vector<16x32xbf16>, vector<32x32xbf16>, vector<16x32xf32> -> vector<16x32xf32>
    %84 = arith.addf %3, %83 : vector<16x32xf32>
    %85 = vector.broadcast %10 : vector<1x32xf32> to vector<16x32xf32>
    %86 = arith.addf %84, %85 : vector<16x32xf32>
    %87 = arith.truncf %86 : vector<16x32xf32> to vector<16x32xbf16>
    %c0_46 = arith.constant 0 : index
    %c0_47 = arith.constant 0 : index
    %88 = vector.load %arg8[%c0_46, %c0_47] : memref<32x128xbf16, #tpu.memory_space<vmem>>, vector<32x128xbf16>
    %cst_48 = arith.constant dense<0.000000e+00> : vector<16x128xf32>
    %89 = tpu.matmul %87, %88, %cst_48 {dimension_numbers = #tpu.dot_dimension_numbers<[1], [0], [0], [1], [0, 0, 1, 1], [], []>} : vector<16x32xbf16>, vector<32x128xbf16>, vector<16x128xf32> -> vector<16x128xf32>
    %90 = vector.broadcast %11 : vector<1x128xf32> to vector<16x128xf32>
    %91 = arith.addf %89, %90 : vector<16x128xf32>
    %cst_49 = arith.constant 0.000000e+00 : f32
    %92 = vector.broadcast %cst_49 : f32 to vector<16x128xf32>
    %93 = arith.maximumf %91, %92 : vector<16x128xf32>
    %94 = arith.truncf %93 : vector<16x128xf32> to vector<16x128xbf16>
    %c0_50 = arith.constant 0 : index
    %c0_51 = arith.constant 0 : index
    %95 = vector.load %arg9[%c0_50, %c0_51] : memref<128x32xbf16, #tpu.memory_space<vmem>>, vector<128x32xbf16>
    %cst_52 = arith.constant dense<0.000000e+00> : vector<16x32xf32>
    %96 = tpu.matmul %94, %95, %cst_52 {dimension_numbers = #tpu.dot_dimension_numbers<[1], [0], [0], [1], [0, 0, 1, 1], [], []>} : vector<16x128xbf16>, vector<128x32xbf16>, vector<16x32xf32> -> vector<16x32xf32>
    %97 = arith.addf %86, %96 : vector<16x32xf32>
    %98 = vector.broadcast %12 : vector<1x32xf32> to vector<16x32xf32>
    %99 = arith.addf %97, %98 : vector<16x32xf32>
    %100 = vector.shape_cast %99 : vector<16x32xf32> to vector<2x8x32xf32>
    %c0_53 = arith.constant 0 : index
    %c0_54 = arith.constant 0 : index
    %c0_55 = arith.constant 0 : index
    %101 = vector.load %arg11[%c0_53, %c0_54, %c0_55] : memref<2x8x32xf32, #tpu.memory_space<vmem>>, vector<2x8x32xf32>
    tpu.vector_store %arg11[%c0_53, %c0_54, %c0_55], %100 {strides = array<i32>} : memref<2x8x32xf32, #tpu.memory_space<vmem>>, vector<2x8x32xf32>,
    return
  }
  func.func @transform_0(%arg0: i32) -> (i32, i32, i32) {
    %c0_i32 = arith.constant 0 : i32
    %c0_i32_0 = arith.constant 0 : i32
    %c0_i32_1 = arith.constant 0 : i32
    return %arg0, %c0_i32, %c0_i32_0 : i32, i32, i32
  }
  func.func @transform_1(%arg0: i32) -> (i32, i32, i32) {
    %c0_i32 = arith.constant 0 : i32
    %c0_i32_0 = arith.constant 0 : i32
    %c0_i32_1 = arith.constant 0 : i32
    return %arg0, %c0_i32, %c0_i32_0 : i32, i32, i32
  }
  func.func @transform_2(%arg0: i32) -> (i32, i32, i32) {
    %c0_i32 = arith.constant 0 : i32
    %c0_i32_0 = arith.constant 0 : i32
    %c0_i32_1 = arith.constant 0 : i32
    return %arg0, %c0_i32, %c0_i32_0 : i32, i32, i32
  }
  func.func @transform_3(%arg0: i32) -> (i32, i32) {
    %c0_i32 = arith.constant 0 : i32
    %c0_i32_0 = arith.constant 0 : i32
    %c0_i32_1 = arith.constant 0 : i32
    return %c0_i32, %c0_i32_0 : i32, i32
  }
  func.func @transform_4(%arg0: i32) -> (i32, i32) {
    %c0_i32 = arith.constant 0 : i32
    %c0_i32_0 = arith.constant 0 : i32
    %c0_i32_1 = arith.constant 0 : i32
    return %c0_i32, %c0_i32_0 : i32, i32
  }
  func.func @transform_5(%arg0: i32) -> (i32, i32) {
    %c0_i32 = arith.constant 0 : i32
    %c0_i32_0 = arith.constant 0 : i32
    %c0_i32_1 = arith.constant 0 : i32
    return %c0_i32, %c0_i32_0 : i32, i32
  }
  func.func @transform_6(%arg0: i32) -> (i32, i32) {
    %c0_i32 = arith.constant 0 : i32
    %c0_i32_0 = arith.constant 0 : i32
    %c0_i32_1 = arith.constant 0 : i32
    return %c0_i32, %c0_i32_0 : i32, i32
  }
  func.func @transform_7(%arg0: i32) -> (i32, i32) {
    %c0_i32 = arith.constant 0 : i32
    %c0_i32_0 = arith.constant 0 : i32
    %c0_i32_1 = arith.constant 0 : i32
    return %c0_i32, %c0_i32_0 : i32, i32
  }
  func.func @transform_8(%arg0: i32) -> (i32, i32) {
    %c0_i32 = arith.constant 0 : i32
    %c0_i32_0 = arith.constant 0 : i32
    %c0_i32_1 = arith.constant 0 : i32
    return %c0_i32, %c0_i32_0 : i32, i32
  }
  func.func @transform_9(%arg0: i32) -> (i32, i32) {
    %c0_i32 = arith.constant 0 : i32
    %c0_i32_0 = arith.constant 0 : i32
    %c0_i32_1 = arith.constant 0 : i32
    return %c0_i32, %c0_i32_0 : i32, i32
  }
  func.func @transform_10(%arg0: i32) -> (i32, i32, i32) {
    %c0_i32 = arith.constant 0 : i32
    %c0_i32_0 = arith.constant 0 : i32
    %c0_i32_1 = arith.constant 0 : i32
    return %arg0, %c0_i32, %c0_i32_0 : i32, i32, i32
  }
  func.func @transform_11(%arg0: i32) -> (i32, i32, i32, i32) {
    %c0_i32 = arith.constant 0 : i32
    %c0_i32_0 = arith.constant 0 : i32
    %c0_i32_1 = arith.constant 0 : i32
    %c0_i32_2 = arith.constant 0 : i32
    return %arg0, %c0_i32, %c0_i32_0, %c0_i32_1 : i32, i32, i32, i32
  }
}

</mosaic_0001>

<llo_original>
// kernel: tpu_custom_call.1
$region0: #{tpu_custom_call.1}
  #allocation0 [shape = 'u32[]', space=smem, size = 0x4, offset = 0x4, fixed_abs, tag = 'smem constant byte address 0x4 - core index']
  #allocation1 [shape = 'u32[144,128]{1,0:T(1,128)}', space=vmem, size = 0x12000, scoped, tag = 'internal scratch']
  %s0 = inlined_call_operand.hbm [shape: f32[16,128], index: 0, kind: input, shape index: {}]
  %s1 = inlined_call_operand.hbm [shape: f32[8,128], index: 1, kind: input, shape index: {}]
  %s2 = inlined_call_operand.hbm [shape: f32[16,128], index: 2, kind: output, shape index: {}]
  %s3 = sld [smem:[#allocation0]]
  $region49: #{tpu_custom_call.1} parent=0
    _
  %s5 = ssub.s32 1, %s3
  %s6 = scalar_select 0, %s5, %s3
  $region1: #{tpu_custom_call.1} parent=0
    #allocation2 [shape = 'u8[8192]{0}', space=vmem, size = 0x2000, scoped, tag = 'input window, operand 0']
    #allocation3 [shape = 's32[2]{0}', space=sflag, size = 0x8, scoped, tag = 'scoped memory for tpu_custom_call.1']
    #allocation4 [shape = 's32[2]{0}', space=sflag, size = 0x8, scoped, tag = 'scoped memory for tpu_custom_call.1']
    #allocation5 [shape = 'u8[4096]{0}', space=vmem, size = 0x1000, scoped, tag = 'input window, operand 1, single buffered']
    #allocation6 [shape = 's32[1]{0}', space=sflag, size = 0x4, scoped, tag = 'scoped memory for tpu_custom_call.1']
    #allocation7 [shape = 'u8[8192]{0}', space=vmem, size = 0x2000, scoped, tag = 'output window, operand 0']
    %7 = vsyncpa [#allocation3], 0
    %s8 = scalar_lea.sflag [#allocation3], 1
    %9 = vsyncpa %s8, 0
    %10 = vsyncpa [#allocation6], 0
    %11 = vsyncpa [#allocation4], 0
    %s12 = scalar_lea.sflag [#allocation4], 1
    %13 = vsyncpa %s12, 0
    loop: start=0, step=1, limit=4
    $region2: #{tpu_custom_call.1} parent=1 // loop_pre_header
      _
    $region3: #{tpu_custom_call.1} parent=1 // loop_header
      %s15 = sphi 0, %s19
      %p16 = scmp.ge.s32.totalorder %s15, 4
      %s25 = sphi 0, %s27
      %s28 = sphi 0, %s25
      %s29 = sphi 0, %s28
      %s45 = sphi 0, %s29
      %s49 = sphi 0, %s49
      %s51 = sphi 0, %s49
      %s52 = sphi 0, %s51
      %s66 = sphi 0, %s52
      %s72 = sphi 0, %s74
      %s75 = sphi 0, %s72
      %s76 = sphi 0, %s75
      %s92 = sphi 0, %s76
    $region4: #{tpu_custom_call.1} parent=1 // loop_header_branch
      %18 = sbr.rel (%p16) target = $region8
    $region5: #{tpu_custom_call.1} parent=1 // loop_body
      %s20 = ssub.s32 %s15, 1
      %s21 = ssub.s32 %s15, 2
      %s22 = sadd.s32 %s15, 1
      %s23 = ssub.s32 %s15, %s22
      %p24 = scmp.eq.s32.totalorder %s23, 0
      %s26 = sadd.s32 %s25, 1
      %s27 = scalar_select %p24, %s25, %s26
      %p30 = pneg %p24
      %p31 = scmp.eq.s32.totalorder %s15, 1
      %p32 = por %p30, %p31
      %p33 = scmp.ne.s32.totalorder %s25, %s28
      %p34 = scmp.eq.s32.totalorder %s15, 0
      %p35 = por %p33, %p34
      %p36 = scmp.ne.s32.totalorder %s25, %s28
      %p37 = scmp.eq.s32.totalorder %s20, 1
      %p38 = por %p36, %p37
      %p39 = scmp.ne.s32.totalorder %s28, %s29
      %p40 = scmp.eq.s32.totalorder %s20, 0
      %p41 = por %p39, %p40
      %p42 = scmp.ne.s32.totalorder %s28, %s29
      %p43 = scmp.eq.s32.totalorder %s21, 1
      %p44 = por %p42, %p43
      %p46 = scmp.ne.s32.totalorder %s29, %s45
      %p47 = scmp.eq.s32.totalorder %s21, 0
      %p48 = por %p46, %p47
      %s50 = sadd.s32 %s49, 1
      %p53 = scmp.eq.s32.totalorder %s15, 1
      %p54 = scmp.ne.s32.totalorder %s49, %s51
      %p55 = scmp.eq.s32.totalorder %s15, 0
      %p56 = por %p54, %p55
      %p57 = scmp.ne.s32.totalorder %s49, %s51
      %p58 = scmp.eq.s32.totalorder %s20, 1
      %p59 = por %p57, %p58
      %p60 = scmp.ne.s32.totalorder %s51, %s52
      %p61 = scmp.eq.s32.totalorder %s20, 0
      %p62 = por %p60, %p61
      %p63 = scmp.ne.s32.totalorder %s51, %s52
      %p64 = scmp.eq.s32.totalorder %s21, 1
      %p65 = por %p63, %p64
      %p67 = scmp.ne.s32.totalorder %s52, %s66
      %p68 = scmp.eq.s32.totalorder %s21, 0
      %p69 = por %p67, %p68
      %s70 = ssub.s32 %s15, %s22
      %p71 = scmp.eq.s32.totalorder %s70, 0
      %s73 = sadd.s32 %s72, 1
      %s74 = scalar_select %p71, %s72, %s73
      %p77 = pneg %p71
      %p78 = scmp.eq.s32.totalorder %s15, 1
      %p79 = por %p77, %p78
      %p80 = scmp.ne.s32.totalorder %s72, %s75
      %p81 = scmp.eq.s32.totalorder %s15, 0
      %p82 = por %p80, %p81
      %p83 = scmp.ne.s32.totalorder %s72, %s75
      %p84 = scmp.eq.s32.totalorder %s20, 1
      %p85 = por %p83, %p84
      %p86 = scmp.ne.s32.totalorder %s75, %s76
      %p87 = scmp.eq.s32.totalorder %s20, 0
      %p88 = por %p86, %p87
      %p89 = scmp.ne.s32.totalorder %s75, %s76
      %p90 = scmp.eq.s32.totalorder %s21, 1
      %p91 = por %p89, %p90
      %p93 = scmp.ne.s32.totalorder %s76, %s92
      %p94 = scmp.eq.s32.totalorder %s21, 0
      %p95 = por %p93, %p94
      %p96 = scmp.le.s32.totalorder 1, %s15
      %p97 = scmp.lt.s32.totalorder %s15, 3
      %p98 = pnand %p96, %p97
      %p99 = pneg %p98
      // Predicated region
      $region9: #{tpu_custom_call.1} parent=5 // pred_check
        _
      $region10: #{tpu_custom_call.1} parent=5 // pred_check_branch
        %101 = sbr.rel (%p98) target = $region12
      $region11: #{tpu_custom_call.1} parent=5 // pred_region
        %s102 = ssub.s32 %s15, 1
        // Predicated region
        $region13: #{tpu_custom_call.1} parent=11 // pred_check
          %p103 = pneg %p62
        $region14: #{tpu_custom_call.1} parent=11 // pred_check_branch
          %105 = sbr.rel (%p103) target = $region16
        $region15: #{tpu_custom_call.1} parent=11 // pred_region
          %s107 = ssub.s32 128, 128
          %108 = vsyncadd [#allocation6], %s107
          %s110 = sshll.u32 [#allocation5], 4
          %s111 = int_to_ptr.vmem [resolvable:$true] %s110
          %113 = dma.hbm_to_vmem [thread:$0]  %s1, 128, %s111, [#allocation6]
        $region16: #{tpu_custom_call.1} parent=11 // pred_fallthru
          _
      $region12: #{tpu_custom_call.1} parent=5 // pred_fallthru
        _
      %p114 = scmp.lt.s32.totalorder %s15, 2
      // Predicated region
      $region17: #{tpu_custom_call.1} parent=5 // pred_check
        %p115 = pneg %p114
      $region18: #{tpu_custom_call.1} parent=5 // pred_check_branch
        %117 = sbr.rel (%p115) target = $region20
      $region19: #{tpu_custom_call.1} parent=5 // pred_region
        // Predicated region
        $region21: #{tpu_custom_call.1} parent=19 // pred_check
          %p118 = pneg %p35
        $region22: #{tpu_custom_call.1} parent=19 // pred_check_branch
          %120 = sbr.rel (%p118) target = $region24
        $region23: #{tpu_custom_call.1} parent=19 // pred_region
          %s121 = sand.u32 %s25, 1
          %s122 = scalar_lea.sflag [#allocation3], %s121
          %s123 = sand.u32 %s25, 1
          %s124 = smul.addr %s123, 8
          %s125 = scalar_lea.vmem [#allocation2], %s124
          %s127 = ssub.s32 128, 128
          %128 = vsyncadd %s122, %s127
          %s129 = smul.addr %s15, 128
          %s130 = scalar_lea.hbm %s0, %s129
          %s132 = sshll.u32 %s125, 4
          %s133 = int_to_ptr.vmem [resolvable:$true] %s132
          %135 = dma.hbm_to_vmem [thread:$0]  %s130, 128, %s133, %s122
        $region24: #{tpu_custom_call.1} parent=19 // pred_fallthru
          _
      $region20: #{tpu_custom_call.1} parent=5 // pred_fallthru
        _
      %p136 = scmp.le.s32.totalorder 1, %s15
      %p137 = scmp.lt.s32.totalorder %s15, 3
      %p138 = pnand %p136, %p137
      %p139 = pneg %p138
      // Predicated region
      $region25: #{tpu_custom_call.1} parent=5 // pred_check
        _
      $region26: #{tpu_custom_call.1} parent=5 // pred_check_branch
        %141 = sbr.rel (%p138) target = $region28
      $region27: #{tpu_custom_call.1} parent=5 // pred_region
        %s142 = ssub.s32 %s15, 1
        %s143 = sand.u32 %s28, 1
        %s144 = scalar_lea.sflag [#allocation3], %s143
        %s145 = sand.u32 %s28, 1
        %s146 = smul.addr %s145, 8
        %s147 = scalar_lea.vmem [#allocation2], %s146
        // Predicated region
        $region29: #{tpu_custom_call.1} parent=27 // pred_check
          %p148 = pneg %p41
        $region30: #{tpu_custom_call.1} parent=27 // pred_check_branch
          %150 = sbr.rel (%p148) target = $region32
        $region31: #{tpu_custom_call.1} parent=27 // pred_region
          %151 = dma.done %s144, 128
        $region32: #{tpu_custom_call.1} parent=27 // pred_fallthru
          _
        // Predicated region
        $region33: #{tpu_custom_call.1} parent=27 // pred_check
          %p152 = pneg %p62
        $region34: #{tpu_custom_call.1} parent=27 // pred_check_branch
          %154 = sbr.rel (%p152) target = $region36
        $region35: #{tpu_custom_call.1} parent=27 // pred_region
          %155 = dma.done [#allocation6], 128
        $region36: #{tpu_custom_call.1} parent=27 // pred_fallthru
          _
        %s156 = sand.u32 %s28, 1
        %s157 = scalar_lea.sflag [#allocation3], %s156
        %s158 = sand.u32 %s28, 1
        %s159 = smul.addr %s158, 8
        %s160 = scalar_lea.vmem [#allocation2], %s159
        %p161 = pneg %p41
        %p162 = pneg %p38
        %p163 = pneg %p62
        %p164 = pneg %p59
        %p165 = pneg %p88
        %p166 = pneg %p85
        %s167 = sand.u32 %s75, 1
        %s168 = scalar_lea.sflag [#allocation4], %s167
        %s169 = sand.u32 %s75, 1
        %s170 = smul.addr %s169, 8
        %s171 = scalar_lea.vmem [#allocation7], %s170
        %v172 = vld [vmem:[%s147] sm:$0xff]
        %v173 = vld [vmem:[#allocation5] sm:$0xff]
        %v174 = vadd.f32 %v172, %v173
        %175 = vst [vmem:[%s171] sm:$0xff] %v174
        %s176 = sand.u32 %s75, 1
        %s177 = scalar_lea.sflag [#allocation4], %s176
        %s178 = sand.u32 %s75, 1
        %s179 = smul.addr %s178, 8
        %s180 = scalar_lea.vmem [#allocation7], %s179
        // Predicated region
        $region37: #{tpu_custom_call.1} parent=27 // pred_check
          %p181 = pneg %p85
        $region38: #{tpu_custom_call.1} parent=27 // pred_check_branch
          %183 = sbr.rel (%p181) target = $region40
        $region39: #{tpu_custom_call.1} parent=27 // pred_region
          %s185 = ssub.s32 128, 128
          %186 = vsyncadd %s177, %s185
          %s187 = smul.addr %s20, 128
          %s188 = scalar_lea.hbm %s2, %s187
          %s190 = sshll.u32 %s180, 4
          %s191 = int_to_ptr.vmem [resolvable:$true] %s190
          %193 = dma.vmem_to_hbm [thread:$0]  %s191, 128, %s188, %s177
        $region40: #{tpu_custom_call.1} parent=27 // pred_fallthru
          _
      $region28: #{tpu_custom_call.1} parent=5 // pred_fallthru
        _
      %p194 = scmp.le.s32.totalorder 2, %s15
      // Predicated region
      $region41: #{tpu_custom_call.1} parent=5 // pred_check
        %p195 = pneg %p194
      $region42: #{tpu_custom_call.1} parent=5 // pred_check_branch
        %197 = sbr.rel (%p195) target = $region44
      $region43: #{tpu_custom_call.1} parent=5 // pred_region
        %s198 = ssub.s32 %s15, 2
        // Predicated region
        $region45: #{tpu_custom_call.1} parent=43 // pred_check
          %p199 = pneg %p91
        $region46: #{tpu_custom_call.1} parent=43 // pred_check_branch
          %201 = sbr.rel (%p199) target = $region48
        $region47: #{tpu_custom_call.1} parent=43 // pred_region
          %s202 = sand.u32 %s76, 1
          %s203 = scalar_lea.sflag [#allocation4], %s202
          %s204 = sand.u32 %s76, 1
          %s205 = smul.addr %s204, 8
          %s206 = scalar_lea.vmem [#allocation7], %s205
          %207 = dma.done %s203, 128
        $region48: #{tpu_custom_call.1} parent=43 // pred_fallthru
          _
      $region44: #{tpu_custom_call.1} parent=5 // pred_fallthru
        _
    $region6: #{tpu_custom_call.1} parent=1 // loop_footer
      %s19 = sadd.s32 1, %s15
    $region7: #{tpu_custom_call.1} parent=1 // loop_footer_branch
      %14 = sbr.rel target = $region3
    $region8: #{tpu_custom_call.1} parent=1 // loop_exit
      _
    %208 = vsyncpa [#allocation3], 1
    %s209 = scalar_lea.sflag [#allocation3], 1
    %210 = vsyncpa %s209, 1
    %211 = vsyncpa [#allocation6], 1
    %212 = vsyncpa [#allocation4], 1
    %s213 = scalar_lea.sflag [#allocation4], 1
    %214 = vsyncpa %s213, 1

// kernel: tpu_custom_call.1
$region0: #{tpu_custom_call.1}
  #allocation0 [shape = 'u32[]', space=smem, size = 0x4, offset = 0x4, fixed_abs, tag = 'smem constant byte address 0x4 - core index']
  #allocation1 [shape = 'u32[144,128]{1,0:T(1,128)}', space=vmem, size = 0x12000, scoped, tag = 'internal scratch']
  %s0 = inlined_call_operand.vmem [shape: f32[2,8,32], index: 0, kind: input, shape index: {}]
  %s1 = inlined_call_operand.vmem [shape: bf16[2,16,32], index: 1, kind: input, shape index: {}]
  %s2 = inlined_call_operand.hbm [shape: f32[2,1,16], index: 2, kind: input, shape index: {}]
  %s3 = inlined_call_operand.vmem [shape: bf16[32,32], index: 3, kind: input, shape index: {}]
  %s4 = inlined_call_operand.vmem [shape: bf16[32,32], index: 4, kind: input, shape index: {}]
  %s5 = inlined_call_operand.vmem [shape: bf16[32,32], index: 5, kind: input, shape index: {}]
  %s6 = inlined_call_operand.hbm [shape: bf16[32,32], index: 6, kind: input, shape index: {}]
  %s7 = inlined_call_operand.hbm [shape: bf16[32,128], index: 7, kind: input, shape index: {}]
  %s8 = inlined_call_operand.vmem [shape: bf16[128,32], index: 8, kind: input, shape index: {}]
  %s9 = inlined_call_operand.vmem [shape: f32[8,128], index: 9, kind: input, shape index: {}]
  %s10 = inlined_call_operand.hbm [shape: f32[2,8,32], index: 10, kind: output, shape index: {0}]
  %s11 = inlined_call_operand.hbm [shape: bf16[2,2,8,16], index: 11, kind: output, shape index: {1}]
  %12 = xla_tuple %s10, %s11
  %s13 = sld [smem:[#allocation0]]
  $region70: #{tpu_custom_call.1} parent=0
    _
  %s15 = ssub.s32 1, %s13
  %s16 = scalar_select 0, %s15, %s13
  $region1: #{tpu_custom_call.1} parent=0
    #allocation2 [shape = 'u8[1024]{0}', space=vmem, size = 0x400, scoped, tag = 'input window, operand 2, single buffered']
    #allocation3 [shape = 's32[1]{0}', space=sflag, size = 0x4, scoped, tag = 'scoped memory for tpu_custom_call.1']
    #allocation4 [shape = 's32[1]{0}', space=sflag, size = 0x4, scoped, tag = 'scoped memory for tpu_custom_call.1']
    #allocation5 [shape = 'u8[8192]{0}', space=vmem, size = 0x2000, scoped, tag = 'input window, operand 6, single buffered']
    #allocation6 [shape = 's32[1]{0}', space=sflag, size = 0x4, scoped, tag = 'scoped memory for tpu_custom_call.1']
    #allocation7 [shape = 'u8[8192]{0}', space=vmem, size = 0x2000, scoped, tag = 'input window, operand 7, single buffered']
    #allocation8 [shape = 'u8[8192]{0}', space=vmem, size = 0x2000, scoped, tag = 'output window, operand 0, single buffered']
    #allocation9 [shape = 'u8[8192]{0}', space=vmem, size = 0x2000, scoped, tag = 'output window, operand 1, single buffered']
    #allocation10 [shape = 's32[1]{0}', space=sflag, size = 0x4, scoped, tag = 'scoped memory for tpu_custom_call.1']
    %17 = vsyncpa [#allocation3], 0
    %18 = vsyncpa [#allocation6], 0
    %19 = vsyncpa [#allocation4], 0
    %20 = vsyncpa [#allocation10], 0
    // Predicated region
    $region2: #{tpu_custom_call.1} parent=1 // pred_check
      _
    $region3: #{tpu_custom_call.1} parent=1 // pred_check_branch
      %22 = sbr.rel (0) target = $region5
    $region4: #{tpu_custom_call.1} parent=1 // pred_region
      _
    $region5: #{tpu_custom_call.1} parent=1 // pred_fallthru
      _
    // Predicated region
    $region6: #{tpu_custom_call.1} parent=1 // pred_check
      _
    $region7: #{tpu_custom_call.1} parent=1 // pred_check_branch
      %24 = sbr.rel (0) target = $region9
    $region8: #{tpu_custom_call.1} parent=1 // pred_region
      _
    $region9: #{tpu_custom_call.1} parent=1 // pred_fallthru
      _
    // Predicated region
    $region10: #{tpu_custom_call.1} parent=1 // pred_check
      _
    $region11: #{tpu_custom_call.1} parent=1 // pred_check_branch
      %26 = sbr.rel (0) target = $region13
    $region12: #{tpu_custom_call.1} parent=1 // pred_region
      %s28 = ssub.s32 32, 32
      %29 = vsyncadd [#allocation3], %s28
      %s30 = sshll.u32 [#allocation2], 4
      %s31 = int_to_ptr.vmem [resolvable:$true] %s30
      %36 = dma.hbm_to_vmem [thread:$0]  %s2, 32, %s31, [#allocation3], 16, 16, 1
    $region13: #{tpu_custom_call.1} parent=1 // pred_fallthru
      _
    // Predicated region
    $region14: #{tpu_custom_call.1} parent=1 // pred_check
      _
    $region15: #{tpu_custom_call.1} parent=1 // pred_check_branch
      %38 = sbr.rel (0) target = $region17
    $region16: #{tpu_custom_call.1} parent=1 // pred_region
      _
    $region17: #{tpu_custom_call.1} parent=1 // pred_fallthru
      _
    // Predicated region
    $region18: #{tpu_custom_call.1} parent=1 // pred_check
      _
    $region19: #{tpu_custom_call.1} parent=1 // pred_check_branch
      %40 = sbr.rel (0) target = $region21
    $region20: #{tpu_custom_call.1} parent=1 // pred_region
      _
    $region21: #{tpu_custom_call.1} parent=1 // pred_fallthru
      _
    // Predicated region
    $region22: #{tpu_custom_call.1} parent=1 // pred_check
      _
    $region23: #{tpu_custom_call.1} parent=1 // pred_check_branch
      %42 = sbr.rel (0) target = $region25
    $region24: #{tpu_custom_call.1} parent=1 // pred_region
      _
    $region25: #{tpu_custom_call.1} parent=1 // pred_fallthru
      _
    // Predicated region
    $region26: #{tpu_custom_call.1} parent=1 // pred_check
      _
    $region27: #{tpu_custom_call.1} parent=1 // pred_check_branch
      %44 = sbr.rel (0) target = $region29
    $region28: #{tpu_custom_call.1} parent=1 // pred_region
      %s46 = ssub.s32 256, 256
      %47 = vsyncadd [#allocation6], %s46
      %s48 = sshll.u32 [#allocation5], 4
      %s49 = int_to_ptr.vmem [resolvable:$true] %s48
      %54 = dma.hbm_to_vmem [thread:$0]  %s6, 256, %s49, [#allocation6], 64, 64, 4
    $region29: #{tpu_custom_call.1} parent=1 // pred_fallthru
      _
    // Predicated region
    $region30: #{tpu_custom_call.1} parent=1 // pred_check
      _
    $region31: #{tpu_custom_call.1} parent=1 // pred_check_branch
      %56 = sbr.rel (0) target = $region33
    $region32: #{tpu_custom_call.1} parent=1 // pred_region
      %s58 = ssub.s32 256, 256
      %59 = vsyncadd [#allocation6], %s58
      %s60 = sshll.u32 [#allocation7], 4
      %s61 = int_to_ptr.vmem [resolvable:$true] %s60
      %66 = dma.hbm_to_vmem [thread:$0]  %s7, 256, %s61, [#allocation6], 64, 64, 4
    $region33: #{tpu_custom_call.1} parent=1 // pred_fallthru
      _
    // Predicated region
    $region34: #{tpu_custom_call.1} parent=1 // pred_check
      _
    $region35: #{tpu_custom_call.1} parent=1 // pred_check_branch
      %68 = sbr.rel (0) target = $region37
    $region36: #{tpu_custom_call.1} parent=1 // pred_region
      _
    $region37: #{tpu_custom_call.1} parent=1 // pred_fallthru
      _
    // Predicated region
    $region38: #{tpu_custom_call.1} parent=1 // pred_check
      _
    $region39: #{tpu_custom_call.1} parent=1 // pred_check_branch
      %70 = sbr.rel (0) target = $region41
    $region40: #{tpu_custom_call.1} parent=1 // pred_region
      _
    $region41: #{tpu_custom_call.1} parent=1 // pred_fallthru
      _
    // Predicated region
    $region42: #{tpu_custom_call.1} parent=1 // pred_check
      _
    $region43: #{tpu_custom_call.1} parent=1 // pred_check_branch
      %72 = sbr.rel (0) target = $region45
    $region44: #{tpu_custom_call.1} parent=1 // pred_region
      %73 = dma.done [#allocation3], 32
    $region45: #{tpu_custom_call.1} parent=1 // pred_fallthru
      _
    // Predicated region
    $region46: #{tpu_custom_call.1} parent=1 // pred_check
      _
    $region47: #{tpu_custom_call.1} parent=1 // pred_check_branch
      %75 = sbr.rel (0) target = $region49
    $region48: #{tpu_custom_call.1} parent=1 // pred_region
      %76 = dma.done [#allocation6], 256
    $region49: #{tpu_custom_call.1} parent=1 // pred_fallthru
      _
    // Predicated region
    $region50: #{tpu_custom_call.1} parent=1 // pred_check
      _
    $region51: #{tpu_custom_call.1} parent=1 // pred_check_branch
      %78 = sbr.rel (0) target = $region53
    $region52: #{tpu_custom_call.1} parent=1 // pred_region
      %79 = dma.done [#allocation6], 256
    $region53: #{tpu_custom_call.1} parent=1 // pred_fallthru
      _
    %v81 = vld [vmem:[%s0] sm:$0xff]
    %v82 = vld [vmem:[%s0 + $0x8] sm:$0xff]
    %v83 = vmul.f32 %v81, 1.5
    %v84 = vmul.f32 %v82, 1.5
    %v85 = vpack.c.bf16 %v84, %v83
    %v86 = vld [vmem:[%s1] sm:$0xf]
    %v87 = vld [vmem:[%s1 + $0x4] sm:$0xf]
    %v88 = vld [vmem:[%s1 + $0x8] sm:$0xf]
    %v89 = vld [vmem:[%s1 + $0xc] sm:$0xf]
    %v90 = vld [vmem:[%s9] sm:$0x1]
    %v91 = vld [vmem:[%s9 + $0x1] sm:$0x1]
    %v92 = vld [vmem:[%s9 + $0x2] sm:$0x1]
    %v93 = vld [vmem:[%s9 + $0x3] sm:$0x1]
    %v94 = vld [vmem:[%s9 + $0x4] sm:$0x1]
    %v95 = vld [vmem:[%s9 + $0x5] sm:$0x1]
    %v96 = vld [vmem:[%s3] sm:$0xf]
    %v97 = vld [vmem:[%s3 + $0x4] sm:$0xf]
    %v98 = vld [vmem:[%s3 + $0x8] sm:$0xf]
    %v99 = vld [vmem:[%s3 + $0xc] sm:$0xf]
    %v100 = vlaneseq
    %v101 = vshrl.u32 %v100, 7
    %v102 = vsub.s32 0, %v101
    %v103 = vrot.slane %v90, %v102
    %v108 = vunpack.c.l.b16 %v96
    %v109 = vunpack.c.l.b16 %v97
    %v110 = vunpack.c.l.b16 %v98
    %v111 = vunpack.c.l.b16 %v99
    %v112 = vpack.c.b16 %v109, %v108
    %v113 = vpack.c.b16 %v111, %v110
    %vm116 = vcmask 261120
    %v118 = vsel %vm116, %v85, 0
    %120 = vmatprep.subr.bf16.mxu0 0
    %121 = vmatpush1.bf16.msra.mxu0 0
    %122 = vmatprep.subr.bf16.mxu0 0
    %123 = vmatpush1.bf16.msra.mxu0 0
    %124 = vmatprep.subr.bf16.mxu0 0
    %125 = vmatpush1.bf16.msra.mxu0 0
    %126 = vmatprep.subr.bf16.mxu0 0
    %127 = vmatpush1.bf16.msra.mxu0 0
    %128 = vmatprep.subr.bf16.mxu0 0
    %129 = vmatpush1.bf16.msra.mxu0 0
    %130 = vmatprep.subr.bf16.mxu0 0
    %131 = vmatpush1.bf16.msra.mxu0 0
    %132 = vmatprep.subr.bf16.mxu0 0
    %133 = vmatpush1.bf16.msra.mxu0 %v113
    %134 = vmatprep.subr.bf16.mxu0 0
    %135 = vmatpush1.bf16.msra.mxu0 %v112
    %136 = vmatprep.subr.bf16.mxu0 0
    %137 = vmatpush2.bf16.msra.mxu0 0
    %138 = vmatprep.subr.bf16.mxu0 0
    %139 = vmatpush2.bf16.msra.mxu0 0
    %140 = vmatprep.subr.bf16.mxu0 0
    %141 = vmatpush2.bf16.msra.mxu0 0
    %142 = vmatprep.subr.bf16.mxu0 0
    %143 = vmatpush2.bf16.msra.mxu0 0
    %144 = vmatprep.subr.bf16.mxu0 0
    %145 = vmatpush2.bf16.msra.mxu0 0
    %146 = vmatprep.subr.bf16.mxu0 0
    %147 = vmatpush2.bf16.msra.mxu0 0
    %148 = vmatprep.subr.bf16.mxu0 0
    %149 = vmatpush2.bf16.msra.mxu0 0
    %150 = vmatprep.subr.bf16.mxu0 0
    %151 = vmatpush2.bf16.msra.mxu0 0
    %152 = vmatprep.mubr.bf16.mxu0 0
    %153 = vmatmul.mubr.bf16.gmra.mxu0 %v118
    %v154 = vpop.f32.mrf.mxu0
    %v155 = vadd.f32 %v103, %v154
    %v156 = vpop.f32.mrf.mxu0
    %v157 = vpop.f32.mrf.mxu0
    %v158 = vadd.f32 %v103, %v157
    %v159 = vpop.f32.mrf.mxu0
    %160 = vdwg.mxu0
    %v161 = vld [vmem:[%s4] sm:$0xf]
    %v162 = vld [vmem:[%s4 + $0x4] sm:$0xf]
    %v163 = vld [vmem:[%s4 + $0x8] sm:$0xf]
    %v164 = vld [vmem:[%s4 + $0xc] sm:$0xf]
    %v165 = vlaneseq
    %v166 = vshrl.u32 %v165, 7
    %v167 = vsub.s32 0, %v166
    %v168 = vrot.slane %v91, %v167
    %v173 = vunpack.c.l.b16 %v86
    %v174 = vunpack.c.l.b16 %v87
    %v175 = vunpack.c.l.b16 %v88
    %v176 = vunpack.c.l.b16 %v89
    %v177 = vpack.c.b16 %v174, %v173
    %v178 = vpack.c.b16 %v176, %v175
    %v183 = vunpack.c.l.b16 %v161
    %v184 = vunpack.c.l.b16 %v162
    %v185 = vunpack.c.l.b16 %v163
    %v186 = vunpack.c.l.b16 %v164
    %v187 = vpack.c.b16 %v184, %v183
    %v188 = vpack.c.b16 %v186, %v185
    %v192 = vsel %vm116, %v177, 0
    %v195 = vsel %vm116, %v178, 0
    %197 = vmatprep.subr.bf16.mxu0 0
    %198 = vmatpush1.bf16.msra.mxu0 0
    %199 = vmatprep.subr.bf16.mxu0 0
    %200 = vmatpush1.bf16.msra.mxu0 0
    %201 = vmatprep.subr.bf16.mxu0 0
    %202 = vmatpush1.bf16.msra.mxu0 0
    %203 = vmatprep.subr.bf16.mxu0 0
    %204 = vmatpush1.bf16.msra.mxu0 0
    %205 = vmatprep.subr.bf16.mxu0 0
    %206 = vmatpush1.bf16.msra.mxu0 0
    %207 = vmatprep.subr.bf16.mxu0 0
    %208 = vmatpush1.bf16.msra.mxu0 0
    %209 = vmatprep.subr.bf16.mxu0 0
    %210 = vmatpush1.bf16.msra.mxu0 %v188
    %211 = vmatprep.subr.bf16.mxu0 0
    %212 = vmatpush1.bf16.msra.mxu0 %v187
    %213 = vmatprep.subr.bf16.mxu0 0
    %214 = vmatpush2.bf16.msra.mxu0 0
    %215 = vmatprep.subr.bf16.mxu0 0
    %216 = vmatpush2.bf16.msra.mxu0 0
    %217 = vmatprep.subr.bf16.mxu0 0
    %218 = vmatpush2.bf16.msra.mxu0 0
    %219 = vmatprep.subr.bf16.mxu0 0
    %220 = vmatpush2.bf16.msra.mxu0 0
    %221 = vmatprep.subr.bf16.mxu0 0
    %222 = vmatpush2.bf16.msra.mxu0 0
    %223 = vmatprep.subr.bf16.mxu0 0
    %224 = vmatpush2.bf16.msra.mxu0 0
    %225 = vmatprep.subr.bf16.mxu0 0
    %226 = vmatpush2.bf16.msra.mxu0 0
    %227 = vmatprep.subr.bf16.mxu0 0
    %228 = vmatpush2.bf16.msra.mxu0 0
    %229 = vmatprep.mubr.bf16.mxu0 0
    %230 = vmatmul.mubr.bf16.gmra.mxu0 %v192
    %v231 = vpop.f32.mrf.mxu0
    %v232 = vadd.f32 %v168, %v231
    %v233 = vpop.f32.mrf.mxu0
    %v234 = vpop.f32.mrf.mxu0
    %v235 = vadd.f32 %v168, %v234
    %v236 = vpop.f32.mrf.mxu0
    %237 = vmatprep.mubr.bf16.mxu0 0
    %238 = vmatmul.mubr.bf16.gmra.mxu0 %v195
    %v239 = vpop.f32.mrf.mxu0
    %v240 = vadd.f32 %v168, %v239
    %v241 = vpop.f32.mrf.mxu0
    %v242 = vpop.f32.mrf.mxu0
    %v243 = vadd.f32 %v168, %v242
    %v244 = vpop.f32.mrf.mxu0
    %245 = vdwg.mxu0
    %v246 = vld [vmem:[%s5] sm:$0xf]
    %v247 = vld [vmem:[%s5 + $0x4] sm:$0xf]
    %v248 = vld [vmem:[%s5 + $0x8] sm:$0xf]
    %v249 = vld [vmem:[%s5 + $0xc] sm:$0xf]
    %v250 = vlaneseq
    %v251 = vshrl.u32 %v250, 7
    %v252 = vsub.s32 0, %v251
    %v253 = vrot.slane %v92, %v252
    %v258 = vunpack.c.l.b16 %v246
    %v259 = vunpack.c.l.b16 %v247
    %v260 = vunpack.c.l.b16 %v248
    %v261 = vunpack.c.l.b16 %v249
    %v262 = vpack.c.b16 %v259, %v258
    %v263 = vpack.c.b16 %v261, %v260
    %266 = vmatprep.subr.bf16.mxu0 0
    %267 = vmatpush1.bf16.msra.mxu0 0
    %268 = vmatprep.subr.bf16.mxu0 0
    %269 = vmatpush1.bf16.msra.mxu0 0
    %270 = vmatprep.subr.bf16.mxu0 0
    %271 = vmatpush1.bf16.msra.mxu0 0
    %272 = vmatprep.subr.bf16.mxu0 0
    %273 = vmatpush1.bf16.msra.mxu0 0
    %274 = vmatprep.subr.bf16.mxu0 0
    %275 = vmatpush1.bf16.msra.mxu0 0
    %276 = vmatprep.subr.bf16.mxu0 0
    %277 = vmatpush1.bf16.msra.mxu0 0
    %278 = vmatprep.subr.bf16.mxu0 0
    %279 = vmatpush1.bf16.msra.mxu0 %v263
    %280 = vmatprep.subr.bf16.mxu0 0
    %281 = vmatpush1.bf16.msra.mxu0 %v262
    %282 = vmatprep.subr.bf16.mxu0 0
    %283 = vmatpush2.bf16.msra.mxu0 0
    %284 = vmatprep.subr.bf16.mxu0 0
    %285 = vmatpush2.bf16.msra.mxu0 0
    %286 = vmatprep.subr.bf16.mxu0 0
    %287 = vmatpush2.bf16.msra.mxu0 0
    %288 = vmatprep.subr.bf16.mxu0 0
    %289 = vmatpush2.bf16.msra.mxu0 0
    %290 = vmatprep.subr.bf16.mxu0 0
    %291 = vmatpush2.bf16.msra.mxu0 0
    %292 = vmatprep.subr.bf16.mxu0 0
    %293 = vmatpush2.bf16.msra.mxu0 0
    %294 = vmatprep.subr.bf16.mxu0 0
    %295 = vmatpush2.bf16.msra.mxu0 0
    %296 = vmatprep.subr.bf16.mxu0 0
    %297 = vmatpush2.bf16.msra.mxu0 0
    %298 = vmatprep.mubr.bf16.mxu0 0
    %299 = vmatmul.mubr.bf16.gmra.mxu0 %v192
    %v300 = vpop.f32.mrf.mxu0
    %v301 = vadd.f32 %v253, %v300
    %v302 = vpop.f32.mrf.mxu0
    %v303 = vpop.f32.mrf.mxu0
    %v304 = vadd.f32 %v253, %v303
    %v305 = vpop.f32.mrf.mxu0
    %306 = vmatprep.mubr.bf16.mxu0 0
    %307 = vmatmul.mubr.bf16.gmra.mxu0 %v195
    %v308 = vpop.f32.mrf.mxu0
    %v309 = vadd.f32 %v253, %v308
    %v310 = vpop.f32.mrf.mxu0
    %v311 = vpop.f32.mrf.mxu0
    %v312 = vadd.f32 %v253, %v311
    %v313 = vpop.f32.mrf.mxu0
    %314 = vdwg.mxu0
    %v315 = vpack.c.bf16 %v158, %v155
    %v317 = vunpack.c.l.b16 %v315
    %v318 = vunpack.c.h.b16 %v315
    %v319 = vpack.c.b16 %v317, %v317
    %v320 = vpack.c.b16 %v318, %v318
    %v321 = vpack.c.bf16 %v235, %v232
    %v322 = vpack.c.bf16 %v243, %v240
    %v323 = vpack.c.bf16 %v304, %v301
    %v324 = vpack.c.bf16 %v312, %v309
    %v325 = vld [vmem:[#allocation2] sm:$0x1]
    %v326 = vld [vmem:[#allocation2 + $0x1] sm:$0x1]
    %vm327 = vcmp.gt.f32.partialorder %v325, 0.5
    %vm328 = vcmp.gt.f32.partialorder %v326, 0.5
    %v329 = vsel %vm327, 0.0, -1e+30
    %v330 = vsel %vm328, 0.0, -1e+30
    %v333 = vlaneseq
    %v334 = vshrl.u32 %v333, 7
    %v335 = vsub.s32 0, %v334
    %v336 = vrot.slane %v329, %v335
    %v337 = vlaneseq
    %v338 = vshrl.u32 %v337, 7
    %v339 = vsub.s32 0, %v338
    %v340 = vrot.slane %v330, %v339
    %vm343 = vcmask 130048
    %v345 = vsel %vm343, %v319, 0
    %v348 = vsel %vm343, %v321, 0
    %350 = vmatprep.subr.bf16.mxu0 0
    %351 = vmatpush1.bf16.xpose.msra.mxu0 0
    %352 = vmatprep.subr.bf16.mxu0 0
    %353 = vmatpush1.bf16.xpose.msra.mxu0 0
    %354 = vmatprep.subr.bf16.mxu0 0
    %355 = vmatpush1.bf16.xpose.msra.mxu0 0
    %356 = vmatprep.subr.bf16.mxu0 0
    %357 = vmatpush1.bf16.xpose.msra.mxu0 0
    %358 = vmatprep.subr.bf16.mxu0 0
    %359 = vmatpush1.bf16.xpose.msra.mxu0 0
    %360 = vmatprep.subr.bf16.mxu0 0
    %361 = vmatpush1.bf16.xpose.msra.mxu0 0
    %362 = vmatprep.subr.bf16.mxu0 0
    %363 = vmatpush1.bf16.xpose.msra.mxu0 0
    %364 = vmatprep.subr.bf16.mxu0 0
    %365 = vmatpush1.bf16.xpose.msra.mxu0 %v348
    %366 = vmatprep.subr.bf16.mxu0 0
    %367 = vmatpush2.bf16.xpose.msra.mxu0 0
    %368 = vmatprep.subr.bf16.mxu0 0
    %369 = vmatpush2.bf16.xpose.msra.mxu0 0
    %370 = vmatprep.subr.bf16.mxu0 0
    %371 = vmatpush2.bf16.xpose.msra.mxu0 0
    %372 = vmatprep.subr.bf16.mxu0 0
    %373 = vmatpush2.bf16.xpose.msra.mxu0 0
    %374 = vmatprep.subr.bf16.mxu0 0
    %375 = vmatpush2.bf16.xpose.msra.mxu0 0
    %376 = vmatprep.subr.bf16.mxu0 0
    %377 = vmatpush2.bf16.xpose.msra.mxu0 0
    %378 = vmatprep.subr.bf16.mxu0 0
    %379 = vmatpush2.bf16.xpose.msra.mxu0 0
    %380 = vmatprep.subr.bf16.mxu0 0
    %381 = vmatpush2.bf16.xpose.msra.mxu0 0
    %382 = vmatprep.mubr.bf16.mxu0 0
    %383 = vmatmul.mubr.bf16.gmra.mxu0 %v345
    %v384 = vpop.f32.mrf.mxu0
    %v385 = vadd.f32 %v336, %v384
    %v386 = vpop.f32.mrf.mxu0
    %v387 = vpop.f32.mrf.mxu0
    %v388 = vpop.f32.mrf.mxu0
    %389 = vdwg.mxu0
    %v391 = vsel %vm343, %v320, 0
    %v394 = vsel %vm343, %v322, 0
    %396 = vmatprep.subr.bf16.mxu0 0
    %397 = vmatpush1.bf16.xpose.msra.mxu0 0
    %398 = vmatprep.subr.bf16.mxu0 0
    %399 = vmatpush1.bf16.xpose.msra.mxu0 0
    %400 = vmatprep.subr.bf16.mxu0 0
    %401 = vmatpush1.bf16.xpose.msra.mxu0 0
    %402 = vmatprep.subr.bf16.mxu0 0
    %403 = vmatpush1.bf16.xpose.msra.mxu0 0
    %404 = vmatprep.subr.bf16.mxu0 0
    %405 = vmatpush1.bf16.xpose.msra.mxu0 0
    %406 = vmatprep.subr.bf16.mxu0 0
    %407 = vmatpush1.bf16.xpose.msra.mxu0 0
    %408 = vmatprep.subr.bf16.mxu0 0
    %409 = vmatpush1.bf16.xpose.msra.mxu0 0
    %410 = vmatprep.subr.bf16.mxu0 0
    %411 = vmatpush1.bf16.xpose.msra.mxu0 %v394
    %412 = vmatprep.subr.bf16.mxu0 0
    %413 = vmatpush2.bf16.xpose.msra.mxu0 0
    %414 = vmatprep.subr.bf16.mxu0 0
    %415 = vmatpush2.bf16.xpose.msra.mxu0 0
    %416 = vmatprep.subr.bf16.mxu0 0
    %417 = vmatpush2.bf16.xpose.msra.mxu0 0
    %418 = vmatprep.subr.bf16.mxu0 0
    %419 = vmatpush2.bf16.xpose.msra.mxu0 0
    %420 = vmatprep.subr.bf16.mxu0 0
    %421 = vmatpush2.bf16.xpose.msra.mxu0 0
    %422 = vmatprep.subr.bf16.mxu0 0
    %423 = vmatpush2.bf16.xpose.msra.mxu0 0
    %424 = vmatprep.subr.bf16.mxu0 0
    %425 = vmatpush2.bf16.xpose.msra.mxu0 0
    %426 = vmatprep.subr.bf16.mxu0 0
    %427 = vmatpush2.bf16.xpose.msra.mxu0 0
    %428 = vmatprep.mubr.bf16.mxu0 0
    %429 = vmatmul.mubr.bf16.gmra.mxu0 %v391
    %v430 = vpop.f32.mrf.mxu0
    %v431 = vadd.f32 %v340, %v430
    %v432 = vpop.f32.mrf.mxu0
    %v433 = vpop.f32.mrf.mxu0
    %v434 = vpop.f32.mrf.mxu0
    %435 = vdwg.mxu0
    %v436 = vsel %vm343, %v385, -inf
    %437 = vmax.xlane.f32.xlu0 %v436
    %v438 = vpop.xlane.xlu0 %437
    %v439 = vsel %vm343, %v431, -inf
    %440 = vmax.xlane.f32.xlu0 %v439
    %v441 = vpop.xlane.xlu0 %440
    %v442 = vsub.f32 %v385, %v438
    %v443 = vsub.f32 %v431, %v441
    %v444 = vmul.f32 %v442, 1.442695
    %v445 = vpow.pop %v444
    %v446 = vmul.f32 %v443, 1.442695
    %v447 = vpow.pop %v446
    %v448 = vsel %vm343, %v445, 0.0
    %449 = vadd.xlane.f32.xlu0 %v448
    %v450 = vpop.xlane.xlu0 %449
    %v451 = vsel %vm343, %v447, 0.0
    %452 = vadd.xlane.f32.xlu0 %v451
    %v453 = vpop.xlane.xlu0 %452
    %v454 = vrcp.pop %v450
    %v455 = vrcp.pop %v453
    %v456 = vmul.f32 %v445, %v454
    %v457 = vmul.f32 %v447, %v455
    %v458 = vpack.c.bf16 %v456, %v456
    %v459 = vpack.c.bf16 %v457, %v457
    %vm460 = vcmask 125952
    %461 = vst.msk [vmem:[#allocation9] sm:$0xf] %vm460, %v458
    %462 = vst.msk [vmem:[#allocation9 + $0x8] sm:$0xf] %vm460, %v459
    %v464 = vsel %vm343, %v458, 0
    %466 = vmatprep.subr.bf16.mxu0 0
    %467 = vmatpush1.bf16.msra.mxu0 0
    %468 = vmatprep.subr.bf16.mxu0 0
    %469 = vmatpush1.bf16.msra.mxu0 0
    %470 = vmatprep.subr.bf16.mxu0 0
    %471 = vmatpush1.bf16.msra.mxu0 0
    %472 = vmatprep.subr.bf16.mxu0 0
    %473 = vmatpush1.bf16.msra.mxu0 0
    %474 = vmatprep.subr.bf16.mxu0 0
    %475 = vmatpush1.bf16.msra.mxu0 0
    %476 = vmatprep.subr.bf16.mxu0 0
    %477 = vmatpush1.bf16.msra.mxu0 0
    %478 = vmatprep.subr.bf16.mxu0 0
    %479 = vmatpush1.bf16.msra.mxu0 0
    %480 = vmatprep.subr.bf16.mxu0 0
    %481 = vmatpush1.bf16.msra.mxu0 %v323
    %482 = vmatprep.subr.bf16.mxu0 0
    %483 = vmatpush2.bf16.msra.mxu0 0
    %484 = vmatprep.subr.bf16.mxu0 0
    %485 = vmatpush2.bf16.msra.mxu0 0
    %486 = vmatprep.subr.bf16.mxu0 0
    %487 = vmatpush2.bf16.msra.mxu0 0
    %488 = vmatprep.subr.bf16.mxu0 0
    %489 = vmatpush2.bf16.msra.mxu0 0
    %490 = vmatprep.subr.bf16.mxu0 0
    %491 = vmatpush2.bf16.msra.mxu0 0
    %492 = vmatprep.subr.bf16.mxu0 0
    %493 = vmatpush2.bf16.msra.mxu0 0
    %494 = vmatprep.subr.bf16.mxu0 0
    %495 = vmatpush2.bf16.msra.mxu0 0
    %496 = vmatprep.subr.bf16.mxu0 0
    %497 = vmatpush2.bf16.msra.mxu0 0
    %498 = vmatprep.mubr.bf16.mxu0 0
    %499 = vmatmul.mubr.bf16.gmra.mxu0 %v464
    %v500 = vpop.f32.mrf.mxu0
    %v501 = vadd.f32 0.0, %v500
    %v502 = vpop.f32.mrf.mxu0
    %v503 = vpop.f32.mrf.mxu0
    %v504 = vpop.f32.mrf.mxu0
    %505 = vdwg.mxu0
    %v507 = vsel %vm343, %v459, 0
    %509 = vmatprep.subr.bf16.mxu0 0
    %510 = vmatpush1.bf16.msra.mxu0 0
    %511 = vmatprep.subr.bf16.mxu0 0
    %512 = vmatpush1.bf16.msra.mxu0 0
    %513 = vmatprep.subr.bf16.mxu0 0
    %514 = vmatpush1.bf16.msra.mxu0 0
    %515 = vmatprep.subr.bf16.mxu0 0
    %516 = vmatpush1.bf16.msra.mxu0 0
    %517 = vmatprep.subr.bf16.mxu0 0
    %518 = vmatpush1.bf16.msra.mxu0 0
    %519 = vmatprep.subr.bf16.mxu0 0
    %520 = vmatpush1.bf16.msra.mxu0 0
    %521 = vmatprep.subr.bf16.mxu0 0
    %522 = vmatpush1.bf16.msra.mxu0 0
    %523 = vmatprep.subr.bf16.mxu0 0
    %524 = vmatpush1.bf16.msra.mxu0 %v324
    %525 = vmatprep.subr.bf16.mxu0 0
    %526 = vmatpush2.bf16.msra.mxu0 0
    %527 = vmatprep.subr.bf16.mxu0 0
    %528 = vmatpush2.bf16.msra.mxu0 0
    %529 = vmatprep.subr.bf16.mxu0 0
    %530 = vmatpush2.bf16.msra.mxu0 0
    %531 = vmatprep.subr.bf16.mxu0 0
    %532 = vmatpush2.bf16.msra.mxu0 0
    %533 = vmatprep.subr.bf16.mxu0 0
    %534 = vmatpush2.bf16.msra.mxu0 0
    %535 = vmatprep.subr.bf16.mxu0 0
    %536 = vmatpush2.bf16.msra.mxu0 0
    %537 = vmatprep.subr.bf16.mxu0 0
    %538 = vmatpush2.bf16.msra.mxu0 0
    %539 = vmatprep.subr.bf16.mxu0 0
    %540 = vmatpush2.bf16.msra.mxu0 0
    %541 = vmatprep.mubr.bf16.mxu0 0
    %542 = vmatmul.mubr.bf16.gmra.mxu0 %v507
    %v543 = vpop.f32.mrf.mxu0
    %v544 = vadd.f32 0.0, %v543
    %v545 = vpop.f32.mrf.mxu0
    %v546 = vpop.f32.mrf.mxu0
    %v547 = vpop.f32.mrf.mxu0
    %548 = vdwg.mxu0
    %549 = vrot.lane.b32.xlu0 %v319, 112
    %v550 = vpop.permute.xlu0 %549
    %552 = vrot.lane.b32.xlu0 %v321, 112
    %v553 = vpop.permute.xlu0 %552
    %v555 = vsel %vm343, %v550, 0
    %v558 = vsel %vm343, %v553, 0
    %560 = vmatprep.subr.bf16.mxu0 0
    %561 = vmatpush1.bf16.xpose.msra.mxu0 0
    %562 = vmatprep.subr.bf16.mxu0 0
    %563 = vmatpush1.bf16.xpose.msra.mxu0 0
    %564 = vmatprep.subr.bf16.mxu0 0
    %565 = vmatpush1.bf16.xpose.msra.mxu0 0
    %566 = vmatprep.subr.bf16.mxu0 0
    %567 = vmatpush1.bf16.xpose.msra.mxu0 0
    %568 = vmatprep.subr.bf16.mxu0 0
    %569 = vmatpush1.bf16.xpose.msra.mxu0 0
    %570 = vmatprep.subr.bf16.mxu0 0
    %571 = vmatpush1.bf16.xpose.msra.mxu0 0
    %572 = vmatprep.subr.bf16.mxu0 0
    %573 = vmatpush1.bf16.xpose.msra.mxu0 0
    %574 = vmatprep.subr.bf16.mxu0 0
    %575 = vmatpush1.bf16.xpose.msra.mxu0 %v558
    %576 = vmatprep.subr.bf16.mxu0 0
    %577 = vmatpush2.bf16.xpose.msra.mxu0 0
    %578 = vmatprep.subr.bf16.mxu0 0
    %579 = vmatpush2.bf16.xpose.msra.mxu0 0
    %580 = vmatprep.subr.bf16.mxu0 0
    %581 = vmatpush2.bf16.xpose.msra.mxu0 0
    %582 = vmatprep.subr.bf16.mxu0 0
    %583 = vmatpush2.bf16.xpose.msra.mxu0 0
    %584 = vmatprep.subr.bf16.mxu0 0
    %585 = vmatpush2.bf16.xpose.msra.mxu0 0
    %586 = vmatprep.subr.bf16.mxu0 0
    %587 = vmatpush2.bf16.xpose.msra.mxu0 0
    %588 = vmatprep.subr.bf16.mxu0 0
    %589 = vmatpush2.bf16.xpose.msra.mxu0 0
    %590 = vmatprep.subr.bf16.mxu0 0
    %591 = vmatpush2.bf16.xpose.msra.mxu0 0
    %592 = vmatprep.mubr.bf16.mxu0 0
    %593 = vmatmul.mubr.bf16.gmra.mxu0 %v555
    %v594 = vpop.f32.mrf.mxu0
    %v595 = vadd.f32 %v336, %v594
    %v596 = vpop.f32.mrf.mxu0
    %v597 = vpop.f32.mrf.mxu0
    %v598 = vpop.f32.mrf.mxu0
    %599 = vdwg.mxu0
    %600 = vrot.lane.b32.xlu0 %v320, 112
    %v601 = vpop.permute.xlu0 %600
    %603 = vrot.lane.b32.xlu0 %v322, 112
    %v604 = vpop.permute.xlu0 %603
    %v606 = vsel %vm343, %v601, 0
    %v609 = vsel %vm343, %v604, 0
    %611 = vmatprep.subr.bf16.mxu0 0
    %612 = vmatpush1.bf16.xpose.msra.mxu0 0
    %613 = vmatprep.subr.bf16.mxu0 0
    %614 = vmatpush1.bf16.xpose.msra.mxu0 0
    %615 = vmatprep.subr.bf16.mxu0 0
    %616 = vmatpush1.bf16.xpose.msra.mxu0 0
    %617 = vmatprep.subr.bf16.mxu0 0
    %618 = vmatpush1.bf16.xpose.msra.mxu0 0
    %619 = vmatprep.subr.bf16.mxu0 0
    %620 = vmatpush1.bf16.xpose.msra.mxu0 0
    %621 = vmatprep.subr.bf16.mxu0 0
    %622 = vmatpush1.bf16.xpose.msra.mxu0 0
    %623 = vmatprep.subr.bf16.mxu0 0
    %624 = vmatpush1.bf16.xpose.msra.mxu0 0
    %625 = vmatprep.subr.bf16.mxu0 0
    %626 = vmatpush1.bf16.xpose.msra.mxu0 %v609
    %627 = vmatprep.subr.bf16.mxu0 0
    %628 = vmatpush2.bf16.xpose.msra.mxu0 0
    %629 = vmatprep.subr.bf16.mxu0 0
    %630 = vmatpush2.bf16.xpose.msra.mxu0 0
    %631 = vmatprep.subr.bf16.mxu0 0
    %632 = vmatpush2.bf16.xpose.msra.mxu0 0
    %633 = vmatprep.subr.bf16.mxu0 0
    %634 = vmatpush2.bf16.xpose.msra.mxu0 0
    %635 = vmatprep.subr.bf16.mxu0 0
    %636 = vmatpush2.bf16.xpose.msra.mxu0 0
    %637 = vmatprep.subr.bf16.mxu0 0
    %638 = vmatpush2.bf16.xpose.msra.mxu0 0
    %639 = vmatprep.subr.bf16.mxu0 0
    %640 = vmatpush2.bf16.xpose.msra.mxu0 0
    %641 = vmatprep.subr.bf16.mxu0 0
    %642 = vmatpush2.bf16.xpose.msra.mxu0 0
    %643 = vmatprep.mubr.bf16.mxu0 0
    %644 = vmatmul.mubr.bf16.gmra.mxu0 %v606
    %v645 = vpop.f32.mrf.mxu0
    %v646 = vadd.f32 %v340, %v645
    %v647 = vpop.f32.mrf.mxu0
    %v648 = vpop.f32.mrf.mxu0
    %v649 = vpop.f32.mrf.mxu0
    %650 = vdwg.mxu0
    %v651 = vsel %vm343, %v595, -inf
    %652 = vmax.xlane.f32.xlu0 %v651
    %v653 = vpop.xlane.xlu0 %652
    %v654 = vsel %vm343, %v646, -inf
    %655 = vmax.xlane.f32.xlu0 %v654
    %v656 = vpop.xlane.xlu0 %655
    %v657 = vsub.f32 %v595, %v653
    %v658 = vsub.f32 %v646, %v656
    %v659 = vmul.f32 %v657, 1.442695
    %v660 = vpow.pop %v659
    %v661 = vmul.f32 %v658, 1.442695
    %v662 = vpow.pop %v661
    %v663 = vsel %vm343, %v660, 0.0
    %664 = vadd.xlane.f32.xlu0 %v663
    %v665 = vpop.xlane.xlu0 %664
    %v666 = vsel %vm343, %v662, 0.0
    %667 = vadd.xlane.f32.xlu0 %v666
    %v668 = vpop.xlane.xlu0 %667
    %v669 = vrcp.pop %v665
    %v670 = vrcp.pop %v668
    %v671 = vmul.f32 %v660, %v669
    %v672 = vmul.f32 %v662, %v670
    %v673 = vpack.c.bf16 %v671, %v671
    %v674 = vpack.c.bf16 %v672, %v672
    %s675 = scalar_lea.vmem [#allocation9], 4
    %676 = vst.msk [vmem:[%s675] sm:$0xf] %vm460, %v673
    %677 = vst.msk [vmem:[%s675 + $0x8] sm:$0xf] %vm460, %v674
    %679 = vrot.lane.b32.xlu0 %v323, 112
    %v680 = vpop.permute.xlu0 %679
    %v683 = vsel %vm343, %v673, 0
    %685 = vmatprep.subr.bf16.mxu0 0
    %686 = vmatpush1.bf16.msra.mxu0 0
    %687 = vmatprep.subr.bf16.mxu0 0
    %688 = vmatpush1.bf16.msra.mxu0 0
    %689 = vmatprep.subr.bf16.mxu0 0
    %690 = vmatpush1.bf16.msra.mxu0 0
    %691 = vmatprep.subr.bf16.mxu0 0
    %692 = vmatpush1.bf16.msra.mxu0 0
    %693 = vmatprep.subr.bf16.mxu0 0
    %694 = vmatpush1.bf16.msra.mxu0 0
    %695 = vmatprep.subr.bf16.mxu0 0
    %696 = vmatpush1.bf16.msra.mxu0 0
    %697 = vmatprep.subr.bf16.mxu0 0
    %698 = vmatpush1.bf16.msra.mxu0 0
    %699 = vmatprep.subr.bf16.mxu0 0
    %700 = vmatpush1.bf16.msra.mxu0 %v680
    %701 = vmatprep.subr.bf16.mxu0 0
    %702 = vmatpush2.bf16.msra.mxu0 0
    %703 = vmatprep.subr.bf16.mxu0 0
    %704 = vmatpush2.bf16.msra.mxu0 0
    %705 = vmatprep.subr.bf16.mxu0 0
    %706 = vmatpush2.bf16.msra.mxu0 0
    %707 = vmatprep.subr.bf16.mxu0 0
    %708 = vmatpush2.bf16.msra.mxu0 0
    %709 = vmatprep.subr.bf16.mxu0 0
    %710 = vmatpush2.bf16.msra.mxu0 0
    %711 = vmatprep.subr.bf16.mxu0 0
    %712 = vmatpush2.bf16.msra.mxu0 0
    %713 = vmatprep.subr.bf16.mxu0 0
    %714 = vmatpush2.bf16.msra.mxu0 0
    %715 = vmatprep.subr.bf16.mxu0 0
    %716 = vmatpush2.bf16.msra.mxu0 0
    %717 = vmatprep.mubr.bf16.mxu0 0
    %718 = vmatmul.mubr.bf16.gmra.mxu0 %v683
    %v719 = vpop.f32.mrf.mxu0
    %v720 = vadd.f32 0.0, %v719
    %v721 = vpop.f32.mrf.mxu0
    %v722 = vpop.f32.mrf.mxu0
    %v723 = vpop.f32.mrf.mxu0
    %724 = vdwg.mxu0
    %726 = vrot.lane.b32.xlu0 %v324, 112
    %v727 = vpop.permute.xlu0 %726
    %v730 = vsel %vm343, %v674, 0
    %732 = vmatprep.subr.bf16.mxu0 0
    %733 = vmatpush1.bf16.msra.mxu0 0
    %734 = vmatprep.subr.bf16.mxu0 0
    %735 = vmatpush1.bf16.msra.mxu0 0
    %736 = vmatprep.subr.bf16.mxu0 0
    %737 = vmatpush1.bf16.msra.mxu0 0
    %738 = vmatprep.subr.bf16.mxu0 0
    %739 = vmatpush1.bf16.msra.mxu0 0
    %740 = vmatprep.subr.bf16.mxu0 0
    %741 = vmatpush1.bf16.msra.mxu0 0
    %742 = vmatprep.subr.bf16.mxu0 0
    %743 = vmatpush1.bf16.msra.mxu0 0
    %744 = vmatprep.subr.bf16.mxu0 0
    %745 = vmatpush1.bf16.msra.mxu0 0
    %746 = vmatprep.subr.bf16.mxu0 0
    %747 = vmatpush1.bf16.msra.mxu0 %v727
    %748 = vmatprep.subr.bf16.mxu0 0
    %749 = vmatpush2.bf16.msra.mxu0 0
    %750 = vmatprep.subr.bf16.mxu0 0
    %751 = vmatpush2.bf16.msra.mxu0 0
    %752 = vmatprep.subr.bf16.mxu0 0
    %753 = vmatpush2.bf16.msra.mxu0 0
    %754 = vmatprep.subr.bf16.mxu0 0
    %755 = vmatpush2.bf16.msra.mxu0 0
    %756 = vmatprep.subr.bf16.mxu0 0
    %757 = vmatpush2.bf16.msra.mxu0 0
    %758 = vmatprep.subr.bf16.mxu0 0
    %759 = vmatpush2.bf16.msra.mxu0 0
    %760 = vmatprep.subr.bf16.mxu0 0
    %761 = vmatpush2.bf16.msra.mxu0 0
    %762 = vmatprep.subr.bf16.mxu0 0
    %763 = vmatpush2.bf16.msra.mxu0 0
    %764 = vmatprep.mubr.bf16.mxu0 0
    %765 = vmatmul.mubr.bf16.gmra.mxu0 %v730
    %v766 = vpop.f32.mrf.mxu0
    %v767 = vadd.f32 0.0, %v766
    %v768 = vpop.f32.mrf.mxu0
    %v769 = vpop.f32.mrf.mxu0
    %v770 = vpop.f32.mrf.mxu0
    %771 = vdwg.mxu0
    %774 = vrot.lane.b32.xlu0 %v720, 16
    %v775 = vpop.permute.xlu0 %774
    %776 = vrot.lane.b32.xlu0 %v767, 16
    %v777 = vpop.permute.xlu0 %776
    %v780 = vsel %vm343, %v501, %v775
    %v781 = vsel %vm343, %v544, %v777
    %v782 = vpack.c.bf16 %v781, %v780
    %v783 = vld [vmem:[#allocation5] sm:$0xf]
    %v784 = vld [vmem:[#allocation5 + $0x4] sm:$0xf]
    %v785 = vld [vmem:[#allocation5 + $0x8] sm:$0xf]
    %v786 = vld [vmem:[#allocation5 + $0xc] sm:$0xf]
    %v791 = vunpack.c.l.b16 %v783
    %v792 = vunpack.c.l.b16 %v784
    %v793 = vunpack.c.l.b16 %v785
    %v794 = vunpack.c.l.b16 %v786
    %v795 = vpack.c.b16 %v792, %v791
    %v796 = vpack.c.b16 %v794, %v793
    %v800 = vsel %vm116, %v782, 0
    %802 = vmatprep.subr.bf16.mxu0 0
    %803 = vmatpush1.bf16.msra.mxu0 0
    %804 = vmatprep.subr.bf16.mxu0 0
    %805 = vmatpush1.bf16.msra.mxu0 0
    %806 = vmatprep.subr.bf16.mxu0 0
    %807 = vmatpush1.bf16.msra.mxu0 0
    %808 = vmatprep.subr.bf16.mxu0 0
    %809 = vmatpush1.bf16.msra.mxu0 0
    %810 = vmatprep.subr.bf16.mxu0 0
    %811 = vmatpush1.bf16.msra.mxu0 0
    %812 = vmatprep.subr.bf16.mxu0 0
    %813 = vmatpush1.bf16.msra.mxu0 0
    %814 = vmatprep.subr.bf16.mxu0 0
    %815 = vmatpush1.bf16.msra.mxu0 %v796
    %816 = vmatprep.subr.bf16.mxu0 0
    %817 = vmatpush1.bf16.msra.mxu0 %v795
    %818 = vmatprep.subr.bf16.mxu0 0
    %819 = vmatpush2.bf16.msra.mxu0 0
    %820 = vmatprep.subr.bf16.mxu0 0
    %821 = vmatpush2.bf16.msra.mxu0 0
    %822 = vmatprep.subr.bf16.mxu0 0
    %823 = vmatpush2.bf16.msra.mxu0 0
    %824 = vmatprep.subr.bf16.mxu0 0
    %825 = vmatpush2.bf16.msra.mxu0 0
    %826 = vmatprep.subr.bf16.mxu0 0
    %827 = vmatpush2.bf16.msra.mxu0 0
    %828 = vmatprep.subr.bf16.mxu0 0
    %829 = vmatpush2.bf16.msra.mxu0 0
    %830 = vmatprep.subr.bf16.mxu0 0
    %831 = vmatpush2.bf16.msra.mxu0 0
    %832 = vmatprep.subr.bf16.mxu0 0
    %833 = vmatpush2.bf16.msra.mxu0 0
    %834 = vmatprep.mubr.bf16.mxu0 0
    %835 = vmatmul.mubr.bf16.gmra.mxu0 %v800
    %v836 = vpop.f32.mrf.mxu0
    %v837 = vadd.f32 0.0, %v836
    %v838 = vpop.f32.mrf.mxu0
    %v839 = vpop.f32.mrf.mxu0
    %v840 = vadd.f32 0.0, %v839
    %v841 = vpop.f32.mrf.mxu0
    %842 = vdwg.mxu0
    %v843 = vadd.f32 %v83, %v837
    %v844 = vadd.f32 %v84, %v840
    %v845 = vlaneseq
    %v846 = vshrl.u32 %v845, 7
    %v847 = vsub.s32 0, %v846
    %v848 = vrot.slane %v93, %v847
    %v849 = vadd.f32 %v843, %v848
    %v850 = vadd.f32 %v844, %v848
    %v851 = vpack.c.bf16 %v850, %v849
    %v852 = vld [vmem:[#allocation7] sm:$0xf]
    %v853 = vld [vmem:[#allocation7 + $0x4] sm:$0xf]
    %v854 = vld [vmem:[#allocation7 + $0x8] sm:$0xf]
    %v855 = vld [vmem:[#allocation7 + $0xc] sm:$0xf]
    %v856 = vlaneseq
    %v857 = vshrl.u32 %v856, 7
    %v858 = vsub.s32 0, %v857
    %v859 = vrot.slane %v94, %v858
    %v864 = vunpack.c.l.b16 %v852
    %v865 = vunpack.c.l.b16 %v853
    %v866 = vunpack.c.l.b16 %v854
    %v867 = vunpack.c.l.b16 %v855
    %v868 = vpack.c.b16 %v865, %v864
    %v869 = vpack.c.b16 %v867, %v866
    %v873 = vsel %vm116, %v851, 0
    %875 = vmatprep.subr.bf16.mxu0 0
    %876 = vmatpush1.bf16.msra.mxu0 0
    %877 = vmatprep.subr.bf16.mxu0 0
    %878 = vmatpush1.bf16.msra.mxu0 0
    %879 = vmatprep.subr.bf16.mxu0 0
    %880 = vmatpush1.bf16.msra.mxu0 0
    %881 = vmatprep.subr.bf16.mxu0 0
    %882 = vmatpush1.bf16.msra.mxu0 0
    %883 = vmatprep.subr.bf16.mxu0 0
    %884 = vmatpush1.bf16.msra.mxu0 0
    %885 = vmatprep.subr.bf16.mxu0 0
    %886 = vmatpush1.bf16.msra.mxu0 0
    %887 = vmatprep.subr.bf16.mxu0 0
    %888 = vmatpush1.bf16.msra.mxu0 %v869
    %889 = vmatprep.subr.bf16.mxu0 0
    %890 = vmatpush1.bf16.msra.mxu0 %v868
    %891 = vmatprep.subr.bf16.mxu0 0
    %892 = vmatpush2.bf16.msra.mxu0 0
    %893 = vmatprep.subr.bf16.mxu0 0
    %894 = vmatpush2.bf16.msra.mxu0 0
    %895 = vmatprep.subr.bf16.mxu0 0
    %896 = vmatpush2.bf16.msra.mxu0 0
    %897 = vmatprep.subr.bf16.mxu0 0
    %898 = vmatpush2.bf16.msra.mxu0 0
    %899 = vmatprep.subr.bf16.mxu0 0
    %900 = vmatpush2.bf16.msra.mxu0 0
    %901 = vmatprep.subr.bf16.mxu0 0
    %902 = vmatpush2.bf16.msra.mxu0 0
    %903 = vmatprep.subr.bf16.mxu0 0
    %904 = vmatpush2.bf16.msra.mxu0 0
    %905 = vmatprep.subr.bf16.mxu0 0
    %906 = vmatpush2.bf16.msra.mxu0 0
    %907 = vmatprep.mubr.bf16.mxu0 0
    %908 = vmatmul.mubr.bf16.gmra.mxu0 %v873
    %v909 = vpop.f32.mrf.mxu0
    %v910 = vadd.f32 %v859, %v909
    %v911 = vpop.f32.mrf.mxu0
    %v912 = vpop.f32.mrf.mxu0
    %v913 = vadd.f32 %v859, %v912
    %v914 = vpop.f32.mrf.mxu0
    %915 = vdwg.mxu0
    %v916 = vmax.f32 %v910, 0.0
    %v917 = vmax.f32 %v913, 0.0
    %v918 = vpack.c.bf16 %v917, %v916
    %v919 = vld [vmem:[%s8] sm:$0xf]
    %v920 = vld [vmem:[%s8 + $0x4] sm:$0xf]
    %v921 = vld [vmem:[%s8 + $0x8] sm:$0xf]
    %v922 = vld [vmem:[%s8 + $0xc] sm:$0xf]
    %v923 = vld [vmem:[%s8 + $0x10] sm:$0xf]
    %v924 = vld [vmem:[%s8 + $0x14] sm:$0xf]
    %v925 = vld [vmem:[%s8 + $0x18] sm:$0xf]
    %v926 = vld [vmem:[%s8 + $0x1c] sm:$0xf]
    %v927 = vld [vmem:[%s8 + $0x20] sm:$0xf]
    %v928 = vld [vmem:[%s8 + $0x24] sm:$0xf]
    %v929 = vld [vmem:[%s8 + $0x28] sm:$0xf]
    %v930 = vld [vmem:[%s8 + $0x2c] sm:$0xf]
    %v931 = vld [vmem:[%s8 + $0x30] sm:$0xf]
    %v932 = vld [vmem:[%s8 + $0x34] sm:$0xf]
    %v933 = vld [vmem:[%s8 + $0x38] sm:$0xf]
    %v934 = vld [vmem:[%s8 + $0x3c] sm:$0xf]
    %v951 = vunpack.c.l.b16 %v919
    %v952 = vunpack.c.l.b16 %v920
    %v953 = vunpack.c.l.b16 %v921
    %v954 = vunpack.c.l.b16 %v922
    %v955 = vunpack.c.l.b16 %v923
    %v956 = vunpack.c.l.b16 %v924
    %v957 = vunpack.c.l.b16 %v925
    %v958 = vunpack.c.l.b16 %v926
    %v959 = vunpack.c.l.b16 %v927
    %v960 = vunpack.c.l.b16 %v928
    %v961 = vunpack.c.l.b16 %v929
    %v962 = vunpack.c.l.b16 %v930
    %v963 = vunpack.c.l.b16 %v931
    %v964 = vunpack.c.l.b16 %v932
    %v965 = vunpack.c.l.b16 %v933
    %v966 = vunpack.c.l.b16 %v934
    %v967 = vpack.c.b16 %v952, %v951
    %v968 = vpack.c.b16 %v954, %v953
    %v969 = vpack.c.b16 %v956, %v955
    %v970 = vpack.c.b16 %v958, %v957
    %v971 = vpack.c.b16 %v960, %v959
    %v972 = vpack.c.b16 %v962, %v961
    %v973 = vpack.c.b16 %v964, %v963
    %v974 = vpack.c.b16 %v966, %v965
    %983 = vmatprep.subr.bf16.mxu0 0
    %984 = vmatpush1.bf16.msra.mxu0 %v974
    %985 = vmatprep.subr.bf16.mxu0 0
    %986 = vmatpush1.bf16.msra.mxu0 %v973
    %987 = vmatprep.subr.bf16.mxu0 0
    %988 = vmatpush1.bf16.msra.mxu0 %v972
    %989 = vmatprep.subr.bf16.mxu0 0
    %990 = vmatpush1.bf16.msra.mxu0 %v971
    %991 = vmatprep.subr.bf16.mxu0 0
    %992 = vmatpush1.bf16.msra.mxu0 %v970
    %993 = vmatprep.subr.bf16.mxu0 0
    %994 = vmatpush1.bf16.msra.mxu0 %v969
    %995 = vmatprep.subr.bf16.mxu0 0
    %996 = vmatpush1.bf16.msra.mxu0 %v968
    %997 = vmatprep.subr.bf16.mxu0 0
    %998 = vmatpush1.bf16.msra.mxu0 %v967
    %999 = vmatprep.subr.bf16.mxu0 0
    %1000 = vmatpush2.bf16.msra.mxu0 0
    %1001 = vmatprep.subr.bf16.mxu0 0
    %1002 = vmatpush2.bf16.msra.mxu0 0
    %1003 = vmatprep.subr.bf16.mxu0 0
    %1004 = vmatpush2.bf16.msra.mxu0 0
    %1005 = vmatprep.subr.bf16.mxu0 0
    %1006 = vmatpush2.bf16.msra.mxu0 0
    %1007 = vmatprep.subr.bf16.mxu0 0
    %1008 = vmatpush2.bf16.msra.mxu0 0
    %1009 = vmatprep.subr.bf16.mxu0 0
    %1010 = vmatpush2.bf16.msra.mxu0 0
    %1011 = vmatprep.subr.bf16.mxu0 0
    %1012 = vmatpush2.bf16.msra.mxu0 0
    %1013 = vmatprep.subr.bf16.mxu0 0
    %1014 = vmatpush2.bf16.msra.mxu0 0
    %1015 = vmatprep.mubr.bf16.mxu0 0
    %1016 = vmatmul.mubr.bf16.gmra.mxu0 %v918
    %v1017 = vpop.f32.mrf.mxu0
    %v1018 = vadd.f32 0.0, %v1017
    %v1019 = vpop.f32.mrf.mxu0
    %v1020 = vpop.f32.mrf.mxu0
    %v1021 = vadd.f32 0.0, %v1020
    %v1022 = vpop.f32.mrf.mxu0
    %1023 = vdwg.mxu0
    %v1024 = vadd.f32 %v849, %v1018
    %v1025 = vadd.f32 %v850, %v1021
    %v1026 = vlaneseq
    %v1027 = vshrl.u32 %v1026, 7
    %v1028 = vsub.s32 0, %v1027
    %v1029 = vrot.slane %v95, %v1028
    %v1030 = vadd.f32 %v1024, %v1029
    %v1031 = vadd.f32 %v1025, %v1029
    %1032 = vst.msk [vmem:[#allocation8] sm:$0xff] %vm116, %v1030
    %1033 = vst.msk [vmem:[#allocation8 + $0x8] sm:$0xff] %vm116, %v1031
    // Predicated region
    $region54: #{tpu_custom_call.1} parent=1 // pred_check
      _
    $region55: #{tpu_custom_call.1} parent=1 // pred_check_branch
      %1035 = sbr.rel (0) target = $region57
    $region56: #{tpu_custom_call.1} parent=1 // pred_region
      %s1037 = ssub.s32 256, 256
      %1038 = vsyncadd [#allocation4], %s1037
      %s1039 = sshll.u32 [#allocation8], 4
      %s1040 = int_to_ptr.vmem [resolvable:$true] %s1039
      %1045 = dma.vmem_to_hbm [thread:$0]  %s1040, 256, %s10, [#allocation4], 128, 128, 8
    $region57: #{tpu_custom_call.1} parent=1 // pred_fallthru
      _
    // Predicated region
    $region58: #{tpu_custom_call.1} parent=1 // pred_check
      _
    $region59: #{tpu_custom_call.1} parent=1 // pred_check_branch
      %1047 = sbr.rel (0) target = $region61
    $region60: #{tpu_custom_call.1} parent=1 // pred_region
      %s1049 = ssub.s32 256, 256
      %1050 = vsyncadd [#allocation10], %s1049
      %s1051 = sshll.u32 [#allocation9], 4
      %s1052 = int_to_ptr.vmem [resolvable:$true] %s1051
      %1057 = dma.vmem_to_hbm [thread:$0]  %s1052, 256, %s11, [#allocation10], 64, 64, 4
    $region61: #{tpu_custom_call.1} parent=1 // pred_fallthru
      _
    // Predicated region
    $region62: #{tpu_custom_call.1} parent=1 // pred_check
      _
    $region63: #{tpu_custom_call.1} parent=1 // pred_check_branch
      %1059 = sbr.rel (0) target = $region65
    $region64: #{tpu_custom_call.1} parent=1 // pred_region
      %1060 = dma.done [#allocation4], 256
    $region65: #{tpu_custom_call.1} parent=1 // pred_fallthru
      _
    // Predicated region
    $region66: #{tpu_custom_call.1} parent=1 // pred_check
      _
    $region67: #{tpu_custom_call.1} parent=1 // pred_check_branch
      %1062 = sbr.rel (0) target = $region69
    $region68: #{tpu_custom_call.1} parent=1 // pred_region
      %1063 = dma.done [#allocation10], 256
    $region69: #{tpu_custom_call.1} parent=1 // pred_fallthru
      _
    %1064 = vsyncpa [#allocation3], 1
    %1065 = vsyncpa [#allocation6], 1
    %1066 = vsyncpa [#allocation4], 1
    %1067 = vsyncpa [#allocation10], 1

</llo_original>
